<compile_context>
chip_gen: v5e
topology: v5e:2x2
jax: 0.10.0
libtpu: 0.0.40
codegen_flags: <defaults>
</compile_context>

<pallas_src>
import functools

import jax
import jax.numpy as jnp
from jax.experimental import pallas as pl
from jax.experimental.pallas import tpu as pltpu


def _round_up(x: int, m: int) -> int:
    return ((x + m - 1) // m) * m


def _mlp_kernel(z_ref, w1_ref, b1_ref, w2_ref, b2_ref, w3_ref, b3_ref,
                out_ref, *, use_sigmoid: bool):
    """3-layer MLP + SiLU (+ optional Sigmoid) on one (TILE_B, prior_dim) batch tile.

    Weights/biases are VMEM-resident across grid steps (constant index_map); only the
    z tile and the (TILE_B, 1) score column move per step, so BlockSpec pipelining
    overlaps the z DMA with compute.  Ragged last tile: out-of-bounds z rows are read
    as padding and computed on, then masked at the output store.  Each output row
    depends only on its own z row, so there is no cross-row contamination.
    """
    # Streamed z tile -> bf16 for the MXU (accumulation stays f32).
    zb = z_ref[...].astype(jnp.bfloat16)                               # (TB, P) bf16

    # Layer 1: Linear + SiLU (f32 accumulation, f32 elementwise math).
    h = jnp.dot(zb, w1_ref[...], preferred_element_type=jnp.float32) + b1_ref[...]
    h = h * jax.nn.sigmoid(h)                                          # SiLU (f32)
    # TODO(synk): nn.Dropout omitted — inference (eval-mode) semantics assumed.

    # Layer 2: Linear + SiLU.
    h = jnp.dot(h.astype(jnp.bfloat16), w2_ref[...],
                preferred_element_type=jnp.float32) + b2_ref[...]
    h = h * jax.nn.sigmoid(h)                                          # SiLU (f32)

    # Layer 3: (TB, Hp) @ (Hp, 1) -> (TB, 1).  Standard-form matmul (no transposed-RHS
    # dot_general, so no large h transpose copy); scalar bias comes from SMEM.
    s = jnp.dot(h.astype(jnp.bfloat16), w3_ref[...],
                preferred_element_type=jnp.float32)                    # (TB, 1) f32
    s = s + b3_ref[0, 0]
    if use_sigmoid:
        s = jax.nn.sigmoid(s)

    out_ref[...] = s.astype(out_ref.dtype)                             # (TB, 1)


def mlp_forward(z, params, mol_property: str, *, tile_b: int = 4096):
    """z: (batch, n_latent, latent_dim). Returns scores like `score.squeeze()`."""
    b = z.shape[0]
    z2d = z.reshape(b, -1)                                             # z.view(b, -1)
    w1, b1, w2, b2, w3, b3 = params
    prior_dim, hidden = w1.shape
    assert z2d.shape[1] == prior_dim
    use_sigmoid = mol_property in ("qed", "sas")

    # ---- Pad hidden to a multiple of 128 lanes (numerically exact: silu(0) = 0, and
    # the padded rows/cols are zero so they contribute nothing in any layer).
    hp = max(128, _round_up(hidden, 128))
    pad = hp - hidden
    if pad:
        w1 = jnp.pad(w1, ((0, 0), (0, pad)))
        b1 = jnp.pad(b1, ((0, 0), (0, pad)))
        w2 = jnp.pad(w2, ((0, pad), (0, pad)))
        b2 = jnp.pad(b2, ((0, 0), (0, pad)))
        w3 = jnp.pad(w3, ((0, pad), (0, 0)))

    # ---- bf16 MXU inputs for the resident weights; biases stay f32 (added after the
    # f32 accumulation).  The scalar last-layer bias is a (1, 1) f32 living in SMEM.
    w1 = w1.astype(jnp.bfloat16)
    w2 = w2.astype(jnp.bfloat16)
    w3 = w3.astype(jnp.bfloat16)
    b1 = b1.astype(jnp.float32)
    b2 = b2.astype(jnp.float32)
    b3 = jnp.asarray(b3, jnp.float32).reshape(1, 1)

    # ---- Batch tile sizing:
    #  * big tile (default 4096) to amortize the ~0.35 us per-grid-step overhead,
    #  * explicitly rounded to a multiple of 128 (lane-dense blocks, (8,128) rule),
    #  * capped so the grid has >= 2 steps when b >= 256 (v7x megacore sharding).
    tile_b = max(128, (min(int(tile_b), _round_up(b, 128)) // 128) * 128)
    if b >= 256:
        tile_b = min(tile_b, _round_up(pl.cdiv(b, 2), 128))
    num_tiles = pl.cdiv(b, tile_b)

    # ---- VMEM budgeting (v7x only has 64 MiB physical / 32 MiB default scoped).
    z_bytes = z2d.dtype.itemsize
    weight_bytes = ((w1.size + w2.size + w3.size) * 2          # bf16 weights
                    + (b1.size + b2.size) * 4 + 4)             # f32 biases
    single_buffer_weights = weight_bytes > (4 << 20)           # only matters when big
    wmode = pl.Buffered(buffer_count=1) if single_buffer_weights else None
    est = (2 * tile_b * prior_dim * z_bytes                    # double-buffered z tile
           + (1 if single_buffer_weights else 2) * weight_bytes
           + 2 * tile_b * 4                                    # double-buffered out col
           + 4 * tile_b * hp * 4)                              # h intermediates headroom
    vmem_limit = int(min(64 << 20, max(32 << 20, int(1.25 * est))))
    # TODO(synk): if even a single-buffered w2 (hp*hp) exceeds the budget, add a K-tiled
    # "arbitrary" grid axis over hidden for layer 2 instead of keeping it resident.

    kernel = functools.partial(_mlp_kernel, use_sigmoid=use_sigmoid)

    flops = 2 * b * (prior_dim * hp + hp * hp + hp)
    transcendentals = b * (2 * hp + (1 if use_sigmoid else 0))
    bytes_accessed = b * prior_dim * z_bytes + weight_bytes + 4 * b

    out = pl.pallas_call(
        kernel,
        out_shape=jax.ShapeDtypeStruct((b, 1), jnp.float32),
        grid=(num_tiles,),
        in_specs=[
            pl.BlockSpec((tile_b, prior_dim), lambda i: (i, 0)),              # z: streamed
            pl.BlockSpec((prior_dim, hp), lambda i: (0, 0), pipeline_mode=wmode),  # w1
            pl.BlockSpec((1, hp), lambda i: (0, 0), pipeline_mode=wmode),          # b1
            pl.BlockSpec((hp, hp), lambda i: (0, 0), pipeline_mode=wmode),         # w2
            pl.BlockSpec((1, hp), lambda i: (0, 0), pipeline_mode=wmode),          # b2
            pl.BlockSpec((hp, 1), lambda i: (0, 0), pipeline_mode=wmode),          # w3
            pl.BlockSpec(memory_space=pltpu.MemorySpace.SMEM),                     # b3
        ],
        out_specs=pl.BlockSpec((tile_b, 1), lambda i: (i, 0)),
        compiler_params=pltpu.CompilerParams(
            dimension_semantics=("parallel",),          # megacore sharding on v7x
            vmem_limit_bytes=vmem_limit),
        cost_estimate=pl.CostEstimate(flops=flops,
                                      transcendentals=transcendentals,
                                      bytes_accessed=bytes_accessed),
    )(z2d, w1, b1, w2, b2, w3, b3)

    return jnp.squeeze(out)                                            # score.squeeze()


def init_params(key, prior_dim, hidden):
    """Deterministic PyTorch-style init, stored in kernel-friendly (in, out) layout."""
    ks = jax.random.split(key, 6)

    def lin(kw, kb, fan_in, fan_out):
        bound = 1.0 / jnp.sqrt(fan_in)
        w = jax.random.uniform(kw, (fan_in, fan_out), jnp.float32, -bound, bound)
        b = jax.random.uniform(kb, (1, fan_out), jnp.float32, -bound, bound)
        return w, b

    w1, b1 = lin(ks[0], ks[1], prior_dim, hidden)
    w2, b2 = lin(ks[2], ks[3], hidden, hidden)
    w3, b3 = lin(ks[4], ks[5], hidden, 1)            # (hidden, 1), (1, 1)
    return (w1, b1, w2, b2, w3, b3)


if __name__ == "__main__":
    # Small config: latent_dim=16, n_latent=2 -> prior_dim=32, mlp_hidden_dim=32.
    # batch=200 with tile_b=128 exercises multi-tile pipelining plus a ragged tile.
    latent_dim, n_latent, hidden, batch = 16, 2, 32, 200
    prior_dim = latent_dim * n_latent

    key = jax.random.PRNGKey(0)
    k_z, k_p = jax.random.split(key)
    z = jax.random.normal(k_z, (batch, n_latent, latent_dim), jnp.float32)
    params = init_params(k_p, prior_dim, hidden)

    score_qed = mlp_forward(z, params, "qed", tile_b=128)    # sigmoid head, 2 grid steps
    score_logp = mlp_forward(z, params, "logp")              # identity head, default tile
    jax.block_until_ready((score_qed, score_logp))

    # ---- References ----------------------------------------------------------------
    w1, b1, w2, b2, w3, b3 = params
    z2d = z.reshape(batch, -1)

    # (a) full-f32 module reference (loose tolerance because the kernel uses bf16 MXU
    #     inputs with f32 accumulation).
    h = jax.nn.silu(z2d @ w1 + b1)
    h = jax.nn.silu(h @ w2 + b2)
    logits_f32 = (h @ w3 + b3).squeeze()

    # (b) bf16-matched reference (same cast points as the kernel) — tight tolerance.
    hb = jnp.dot(z2d.astype(jnp.bfloat16), w1.astype(jnp.bfloat16),
                 preferred_element_type=jnp.float32) + b1
    hb = hb * jax.nn.sigmoid(hb)
    hb = jnp.dot(hb.astype(jnp.bfloat16), w2.astype(jnp.bfloat16),
                 preferred_element_type=jnp.float32) + b2
    hb = hb * jax.nn.sigmoid(hb)
    logits_bf16 = (jnp.dot(hb.astype(jnp.bfloat16), w3.astype(jnp.bfloat16),
                           preferred_element_type=jnp.float32) + b3).squeeze()

    assert score_qed.shape == (batch,)
    assert score_logp.shape == (batch,)
    assert jnp.allclose(score_logp, logits_bf16, atol=2e-3, rtol=2e-3)
    assert jnp.allclose(score_qed, jax.nn.sigmoid(logits_bf16), atol=2e-3, rtol=2e-3)
    assert jnp.allclose(score_logp, logits_f32, atol=5e-2, rtol=5e-2)
    assert jnp.allclose(score_qed, jax.nn.sigmoid(logits_f32), atol=2e-2)

    print("KERNEL_OK")
</pallas_src>

<mosaic_0001>
module attributes {stable_mosaic.version = 11 : i64} {
  func.func @_mlp_kernel(%arg0: i32, %arg1: memref<128x32xf32, #tpu.memory_space<vmem>>, %arg2: memref<32x128xbf16, #tpu.memory_space<vmem>>, %arg3: memref<1x128xf32, #tpu.memory_space<vmem>>, %arg4: memref<128x128xbf16, #tpu.memory_space<vmem>>, %arg5: memref<1x128xf32, #tpu.memory_space<vmem>>, %arg6: memref<128x1xbf16, #tpu.memory_space<vmem>>, %arg7: memref<1x1xf32, #tpu.memory_space<smem>>, %arg8: memref<128x1xf32, #tpu.memory_space<vmem>>) attributes {dimension_semantics = [#tpu.dimension_semantics<parallel>], iteration_bounds = array<i64: 2>, scalar_prefetch = 0 : i64, scratch_operands = 0 : i64, tpu.core_type = #tpu.core_type<tc>, window_params = [{transform_indices = @transform_0, window_bounds = array<i64: 128, 32>}, {pipeline_mode = #tpu.pipeline_mode<synchronous>, transform_indices = @transform_1, window_bounds = array<i64: 32, 128>}, {pipeline_mode = #tpu.pipeline_mode<synchronous>, transform_indices = @transform_2, window_bounds = array<i64: 1, 128>}, {pipeline_mode = #tpu.pipeline_mode<synchronous>, transform_indices = @transform_3, window_bounds = array<i64: 128, 128>}, {pipeline_mode = #tpu.pipeline_mode<synchronous>, transform_indices = @transform_4, window_bounds = array<i64: 1, 128>}, {pipeline_mode = #tpu.pipeline_mode<synchronous>, transform_indices = @transform_5, window_bounds = array<i64: 128, 1>}, {transform_indices = @transform_6, window_bounds = array<i64: 1, 1>}, {transform_indices = @transform_7, window_bounds = array<i64: 128, 1>}]} {
    %c0 = arith.constant 0 : index
    %c0_0 = arith.constant 0 : index
    %0 = vector.load %arg1[%c0, %c0_0] : memref<128x32xf32, #tpu.memory_space<vmem>>, vector<128x32xf32>
    %1 = arith.truncf %0 : vector<128x32xf32> to vector<128x32xbf16>
    %c0_1 = arith.constant 0 : index
    %c0_2 = arith.constant 0 : index
    %2 = vector.load %arg2[%c0_1, %c0_2] : memref<32x128xbf16, #tpu.memory_space<vmem>>, vector<32x128xbf16>
    %cst = arith.constant dense<0.000000e+00> : vector<128x128xf32>
    %3 = tpu.matmul %1, %2, %cst {dimension_numbers = #tpu.dot_dimension_numbers<[1], [0], [0], [1], [0, 0, 1, 1], [], []>} : vector<128x32xbf16>, vector<32x128xbf16>, vector<128x128xf32> -> vector<128x128xf32>
    %c0_3 = arith.constant 0 : index
    %c0_4 = arith.constant 0 : index
    %4 = vector.load %arg3[%c0_3, %c0_4] : memref<1x128xf32, #tpu.memory_space<vmem>>, vector<1x128xf32>
    %5 = vector.broadcast %4 : vector<1x128xf32> to vector<128x128xf32>
    %6 = arith.addf %3, %5 : vector<128x128xf32>
    %7 = arith.negf %6 : vector<128x128xf32>
    %8 = math.exp %7 : vector<128x128xf32>
    %cst_5 = arith.constant 1.000000e+00 : f32
    %9 = vector.broadcast %cst_5 : f32 to vector<128x128xf32>
    %10 = arith.addf %9, %8 : vector<128x128xf32>
    %11 = arith.divf %9, %10 : vector<128x128xf32>
    %12 = arith.mulf %6, %11 : vector<128x128xf32>
    %13 = arith.truncf %12 : vector<128x128xf32> to vector<128x128xbf16>
    %c0_6 = arith.constant 0 : index
    %c0_7 = arith.constant 0 : index
    %14 = vector.load %arg4[%c0_6, %c0_7] : memref<128x128xbf16, #tpu.memory_space<vmem>>, vector<128x128xbf16>
    %cst_8 = arith.constant dense<0.000000e+00> : vector<128x128xf32>
    %15 = tpu.matmul %13, %14, %cst_8 {dimension_numbers = #tpu.dot_dimension_numbers<[1], [0], [0], [1], [0, 0, 1, 1], [], []>} : vector<128x128xbf16>, vector<128x128xbf16>, vector<128x128xf32> -> vector<128x128xf32>
    %c0_9 = arith.constant 0 : index
    %c0_10 = arith.constant 0 : index
    %16 = vector.load %arg5[%c0_9, %c0_10] : memref<1x128xf32, #tpu.memory_space<vmem>>, vector<1x128xf32>
    %17 = vector.broadcast %16 : vector<1x128xf32> to vector<128x128xf32>
    %18 = arith.addf %15, %17 : vector<128x128xf32>
    %19 = arith.negf %18 : vector<128x128xf32>
    %20 = math.exp %19 : vector<128x128xf32>
    %cst_11 = arith.constant 1.000000e+00 : f32
    %21 = vector.broadcast %cst_11 : f32 to vector<128x128xf32>
    %22 = arith.addf %21, %20 : vector<128x128xf32>
    %23 = arith.divf %21, %22 : vector<128x128xf32>
    %24 = arith.mulf %18, %23 : vector<128x128xf32>
    %25 = arith.truncf %24 : vector<128x128xf32> to vector<128x128xbf16>
    %c0_12 = arith.constant 0 : index
    %c0_13 = arith.constant 0 : index
    %26 = vector.load %arg6[%c0_12, %c0_13] : memref<128x1xbf16, #tpu.memory_space<vmem>>, vector<128x1xbf16>
    %cst_14 = arith.constant dense<0.000000e+00> : vector<128x1xf32>
    %27 = tpu.matmul %25, %26, %cst_14 {dimension_numbers = #tpu.dot_dimension_numbers<[1], [0], [0], [1], [0, 0, 1, 1], [], []>} : vector<128x128xbf16>, vector<128x1xbf16>, vector<128x1xf32> -> vector<128x1xf32>
    %c0_15 = arith.constant 0 : index
    %c0_16 = arith.constant 0 : index
    %28 = memref.load %arg7[%c0_15, %c0_16] : memref<1x1xf32, #tpu.memory_space<smem>>
    %29 = vector.broadcast %28 : f32 to vector<128x1xf32>
    %30 = arith.addf %27, %29 : vector<128x1xf32>
    %31 = arith.negf %30 : vector<128x1xf32>
    %32 = math.exp %31 : vector<128x1xf32>
    %cst_17 = arith.constant 1.000000e+00 : f32
    %33 = vector.broadcast %cst_17 : f32 to vector<128x1xf32>
    %34 = arith.addf %33, %32 : vector<128x1xf32>
    %35 = arith.divf %33, %34 : vector<128x1xf32>
    %c0_18 = arith.constant 0 : index
    %c0_19 = arith.constant 0 : index
    %36 = vector.load %arg8[%c0_18, %c0_19] : memref<128x1xf32, #tpu.memory_space<vmem>>, vector<128x1xf32>
    tpu.vector_store %arg8[%c0_18, %c0_19], %35 {strides = array<i32>} : memref<128x1xf32, #tpu.memory_space<vmem>>, vector<128x1xf32>,
    return
  }
  func.func @transform_0(%arg0: i32) -> (i32, i32) {
    %c0_i32 = arith.constant 0 : i32
    %c0_i32_0 = arith.constant 0 : i32
    return %arg0, %c0_i32 : i32, i32
  }
  func.func @transform_1(%arg0: i32) -> (i32, i32) {
    %c0_i32 = arith.constant 0 : i32
    %c0_i32_0 = arith.constant 0 : i32
    %c0_i32_1 = arith.constant 0 : i32
    return %c0_i32, %c0_i32_0 : i32, i32
  }
  func.func @transform_2(%arg0: i32) -> (i32, i32) {
    %c0_i32 = arith.constant 0 : i32
    %c0_i32_0 = arith.constant 0 : i32
    %c0_i32_1 = arith.constant 0 : i32
    return %c0_i32, %c0_i32_0 : i32, i32
  }
  func.func @transform_3(%arg0: i32) -> (i32, i32) {
    %c0_i32 = arith.constant 0 : i32
    %c0_i32_0 = arith.constant 0 : i32
    %c0_i32_1 = arith.constant 0 : i32
    return %c0_i32, %c0_i32_0 : i32, i32
  }
  func.func @transform_4(%arg0: i32) -> (i32, i32) {
    %c0_i32 = arith.constant 0 : i32
    %c0_i32_0 = arith.constant 0 : i32
    %c0_i32_1 = arith.constant 0 : i32
    return %c0_i32, %c0_i32_0 : i32, i32
  }
  func.func @transform_5(%arg0: i32) -> (i32, i32) {
    %c0_i32 = arith.constant 0 : i32
    %c0_i32_0 = arith.constant 0 : i32
    %c0_i32_1 = arith.constant 0 : i32
    return %c0_i32, %c0_i32_0 : i32, i32
  }
  func.func @transform_6(%arg0: i32) -> (i32, i32) {
    %c0_i32 = arith.constant 0 : i32
    %c0_i32_0 = arith.constant 0 : i32
    %c0_i32_1 = arith.constant 0 : i32
    return %c0_i32, %c0_i32_0 : i32, i32
  }
  func.func @transform_7(%arg0: i32) -> (i32, i32) {
    %c0_i32 = arith.constant 0 : i32
    %c0_i32_0 = arith.constant 0 : i32
    return %arg0, %c0_i32 : i32, i32
  }
}

</mosaic_0001>

<llo_original>
// kernel: tpu_custom_call.1
$region0: #{tpu_custom_call.1}
  #allocation0 [shape = 'u32[]', space=smem, size = 0x4, offset = 0x4, fixed_abs, tag = 'smem constant byte address 0x4 - core index']
  #allocation1 [shape = 'u32[72,128]{1,0:T(1,128)}', space=vmem, size = 0x9000, scoped, tag = 'internal scratch']
  #allocation2 [shape = 'f32[1,1]{1,0:T(1,128)S(6)}', space=smem, size = 0x200, scoped, tag = 'scoped memory for tpu_custom_call.1']
  %s0 = inlined_call_operand.vmem [shape: f32[200,32], index: 0, kind: input, shape index: {}]
  %s1 = inlined_call_operand.vmem [shape: bf16[32,128], index: 1, kind: input, shape index: {}]
  %s2 = inlined_call_operand.vmem [shape: f32[1,128], index: 2, kind: input, shape index: {}]
  %s3 = inlined_call_operand.vmem [shape: bf16[128,128], index: 3, kind: input, shape index: {}]
  %s4 = inlined_call_operand.vmem [shape: f32[1,128], index: 4, kind: input, shape index: {}]
  %s5 = inlined_call_operand.vmem [shape: bf16[128,1], index: 5, kind: input, shape index: {}]
  %s6 = inlined_call_operand.<no memory space> [shape: f32[1,1], index: 6, kind: input, shape index: {}]
  %s7 = inlined_call_operand.vmem [shape: f32[200,1], index: 7, kind: output, shape index: {}]
  %s8 = sld [smem:[#allocation0]]
  $region109: #{tpu_custom_call.1} parent=0
    _
  %s10 = ssub.s32 1, %s8
  %s11 = scalar_select 0, %s10, %s8
  %12 = sst [smem:[#allocation2]] %s6
  $region1: #{tpu_custom_call.1} parent=0
    #allocation3 [shape = 'u8[131072]{0}', space=vmem, size = 0x20000, scoped, tag = 'output window, operand 0']
    loop: start=0, step=1, limit=4
    $region2: #{tpu_custom_call.1} parent=1 // loop_pre_header
      _
    $region3: #{tpu_custom_call.1} parent=1 // loop_header
      %s14 = sphi 0, %s18
      %p15 = scmp.ge.s32.totalorder %s14, 4
      %s24 = sphi 0, %s26
      %s27 = sphi 0, %s24
      %s28 = sphi 0, %s27
      %s44 = sphi 0, %s28
      %s48 = sphi 0, %s48
      %s50 = sphi 0, %s48
      %s51 = sphi 0, %s50
      %s65 = sphi 0, %s51
      %s69 = sphi 0, %s69
      %s71 = sphi 0, %s69
      %s72 = sphi 0, %s71
      %s86 = sphi 0, %s72
      %s90 = sphi 0, %s90
      %s92 = sphi 0, %s90
      %s93 = sphi 0, %s92
      %s107 = sphi 0, %s93
      %s111 = sphi 0, %s111
      %s113 = sphi 0, %s111
      %s114 = sphi 0, %s113
      %s128 = sphi 0, %s114
      %s132 = sphi 0, %s132
      %s134 = sphi 0, %s132
      %s135 = sphi 0, %s134
      %s149 = sphi 0, %s135
      %s153 = sphi 0, %s153
      %s155 = sphi 0, %s153
      %s156 = sphi 0, %s155
      %s170 = sphi 0, %s156
      %s176 = sphi 0, %s178
      %s179 = sphi 0, %s176
      %s180 = sphi 0, %s179
      %s196 = sphi 0, %s180
    $region4: #{tpu_custom_call.1} parent=1 // loop_header_branch
      %17 = sbr.rel (%p15) target = $region8
    $region5: #{tpu_custom_call.1} parent=1 // loop_body
      %s19 = ssub.s32 %s14, 1
      %s20 = ssub.s32 %s14, 2
      %s21 = sadd.s32 %s14, 1
      %s22 = ssub.s32 %s14, %s21
      %p23 = scmp.eq.s32.totalorder %s22, 0
      %s25 = sadd.s32 %s24, 1
      %s26 = scalar_select %p23, %s24, %s25
      %p29 = pneg %p23
      %p30 = scmp.eq.s32.totalorder %s14, 1
      %p31 = por %p29, %p30
      %p32 = scmp.ne.s32.totalorder %s24, %s27
      %p33 = scmp.eq.s32.totalorder %s14, 0
      %p34 = por %p32, %p33
      %p35 = scmp.ne.s32.totalorder %s24, %s27
      %p36 = scmp.eq.s32.totalorder %s19, 1
      %p37 = por %p35, %p36
      %p38 = scmp.ne.s32.totalorder %s27, %s28
      %p39 = scmp.eq.s32.totalorder %s19, 0
      %p40 = por %p38, %p39
      %p41 = scmp.ne.s32.totalorder %s27, %s28
      %p42 = scmp.eq.s32.totalorder %s20, 1
      %p43 = por %p41, %p42
      %p45 = scmp.ne.s32.totalorder %s28, %s44
      %p46 = scmp.eq.s32.totalorder %s20, 0
      %p47 = por %p45, %p46
      %s49 = sadd.s32 %s48, 1
      %p52 = scmp.eq.s32.totalorder %s14, 1
      %p53 = scmp.ne.s32.totalorder %s48, %s50
      %p54 = scmp.eq.s32.totalorder %s14, 0
      %p55 = por %p53, %p54
      %p56 = scmp.ne.s32.totalorder %s48, %s50
      %p57 = scmp.eq.s32.totalorder %s19, 1
      %p58 = por %p56, %p57
      %p59 = scmp.ne.s32.totalorder %s50, %s51
      %p60 = scmp.eq.s32.totalorder %s19, 0
      %p61 = por %p59, %p60
      %p62 = scmp.ne.s32.totalorder %s50, %s51
      %p63 = scmp.eq.s32.totalorder %s20, 1
      %p64 = por %p62, %p63
      %p66 = scmp.ne.s32.totalorder %s51, %s65
      %p67 = scmp.eq.s32.totalorder %s20, 0
      %p68 = por %p66, %p67
      %s70 = sadd.s32 %s69, 1
      %p73 = scmp.eq.s32.totalorder %s14, 1
      %p74 = scmp.ne.s32.totalorder %s69, %s71
      %p75 = scmp.eq.s32.totalorder %s14, 0
      %p76 = por %p74, %p75
      %p77 = scmp.ne.s32.totalorder %s69, %s71
      %p78 = scmp.eq.s32.totalorder %s19, 1
      %p79 = por %p77, %p78
      %p80 = scmp.ne.s32.totalorder %s71, %s72
      %p81 = scmp.eq.s32.totalorder %s19, 0
      %p82 = por %p80, %p81
      %p83 = scmp.ne.s32.totalorder %s71, %s72
      %p84 = scmp.eq.s32.totalorder %s20, 1
      %p85 = por %p83, %p84
      %p87 = scmp.ne.s32.totalorder %s72, %s86
      %p88 = scmp.eq.s32.totalorder %s20, 0
      %p89 = por %p87, %p88
      %s91 = sadd.s32 %s90, 1
      %p94 = scmp.eq.s32.totalorder %s14, 1
      %p95 = scmp.ne.s32.totalorder %s90, %s92
      %p96 = scmp.eq.s32.totalorder %s14, 0
      %p97 = por %p95, %p96
      %p98 = scmp.ne.s32.totalorder %s90, %s92
      %p99 = scmp.eq.s32.totalorder %s19, 1
      %p100 = por %p98, %p99
      %p101 = scmp.ne.s32.totalorder %s92, %s93
      %p102 = scmp.eq.s32.totalorder %s19, 0
      %p103 = por %p101, %p102
      %p104 = scmp.ne.s32.totalorder %s92, %s93
      %p105 = scmp.eq.s32.totalorder %s20, 1
      %p106 = por %p104, %p105
      %p108 = scmp.ne.s32.totalorder %s93, %s107
      %p109 = scmp.eq.s32.totalorder %s20, 0
      %p110 = por %p108, %p109
      %s112 = sadd.s32 %s111, 1
      %p115 = scmp.eq.s32.totalorder %s14, 1
      %p116 = scmp.ne.s32.totalorder %s111, %s113
      %p117 = scmp.eq.s32.totalorder %s14, 0
      %p118 = por %p116, %p117
      %p119 = scmp.ne.s32.totalorder %s111, %s113
      %p120 = scmp.eq.s32.totalorder %s19, 1
      %p121 = por %p119, %p120
      %p122 = scmp.ne.s32.totalorder %s113, %s114
      %p123 = scmp.eq.s32.totalorder %s19, 0
      %p124 = por %p122, %p123
      %p125 = scmp.ne.s32.totalorder %s113, %s114
      %p126 = scmp.eq.s32.totalorder %s20, 1
      %p127 = por %p125, %p126
      %p129 = scmp.ne.s32.totalorder %s114, %s128
      %p130 = scmp.eq.s32.totalorder %s20, 0
      %p131 = por %p129, %p130
      %s133 = sadd.s32 %s132, 1
      %p136 = scmp.eq.s32.totalorder %s14, 1
      %p137 = scmp.ne.s32.totalorder %s132, %s134
      %p138 = scmp.eq.s32.totalorder %s14, 0
      %p139 = por %p137, %p138
      %p140 = scmp.ne.s32.totalorder %s132, %s134
      %p141 = scmp.eq.s32.totalorder %s19, 1
      %p142 = por %p140, %p141
      %p143 = scmp.ne.s32.totalorder %s134, %s135
      %p144 = scmp.eq.s32.totalorder %s19, 0
      %p145 = por %p143, %p144
      %p146 = scmp.ne.s32.totalorder %s134, %s135
      %p147 = scmp.eq.s32.totalorder %s20, 1
      %p148 = por %p146, %p147
      %p150 = scmp.ne.s32.totalorder %s135, %s149
      %p151 = scmp.eq.s32.totalorder %s20, 0
      %p152 = por %p150, %p151
      %s154 = sadd.s32 %s153, 1
      %p157 = scmp.eq.s32.totalorder %s14, 1
      %p158 = scmp.ne.s32.totalorder %s153, %s155
      %p159 = scmp.eq.s32.totalorder %s14, 0
      %p160 = por %p158, %p159
      %p161 = scmp.ne.s32.totalorder %s153, %s155
      %p162 = scmp.eq.s32.totalorder %s19, 1
      %p163 = por %p161, %p162
      %p164 = scmp.ne.s32.totalorder %s155, %s156
      %p165 = scmp.eq.s32.totalorder %s19, 0
      %p166 = por %p164, %p165
      %p167 = scmp.ne.s32.totalorder %s155, %s156
      %p168 = scmp.eq.s32.totalorder %s20, 1
      %p169 = por %p167, %p168
      %p171 = scmp.ne.s32.totalorder %s156, %s170
      %p172 = scmp.eq.s32.totalorder %s20, 0
      %p173 = por %p171, %p172
      %s174 = ssub.s32 %s14, %s21
      %p175 = scmp.eq.s32.totalorder %s174, 0
      %s177 = sadd.s32 %s176, 1
      %s178 = scalar_select %p175, %s176, %s177
      %p181 = pneg %p175
      %p182 = scmp.eq.s32.totalorder %s14, 1
      %p183 = por %p181, %p182
      %p184 = scmp.ne.s32.totalorder %s176, %s179
      %p185 = scmp.eq.s32.totalorder %s14, 0
      %p186 = por %p184, %p185
      %p187 = scmp.ne.s32.totalorder %s176, %s179
      %p188 = scmp.eq.s32.totalorder %s19, 1
      %p189 = por %p187, %p188
      %p190 = scmp.ne.s32.totalorder %s179, %s180
      %p191 = scmp.eq.s32.totalorder %s19, 0
      %p192 = por %p190, %p191
      %p193 = scmp.ne.s32.totalorder %s179, %s180
      %p194 = scmp.eq.s32.totalorder %s20, 1
      %p195 = por %p193, %p194
      %p197 = scmp.ne.s32.totalorder %s180, %s196
      %p198 = scmp.eq.s32.totalorder %s20, 0
      %p199 = por %p197, %p198
      %p200 = scmp.le.s32.totalorder 1, %s14
      %p201 = scmp.lt.s32.totalorder %s14, 3
      %p202 = pnand %p200, %p201
      %p203 = pneg %p202
      // Predicated region
      $region9: #{tpu_custom_call.1} parent=5 // pred_check
        _
      $region10: #{tpu_custom_call.1} parent=5 // pred_check_branch
        %205 = sbr.rel (%p202) target = $region12
      $region11: #{tpu_custom_call.1} parent=5 // pred_region
        %s206 = ssub.s32 %s14, 1
        // Predicated region
        $region13: #{tpu_custom_call.1} parent=11 // pred_check
          %p207 = pneg %p61
        $region14: #{tpu_custom_call.1} parent=11 // pred_check_branch
          %209 = sbr.rel (%p207) target = $region16
        $region15: #{tpu_custom_call.1} parent=11 // pred_region
          _
        $region16: #{tpu_custom_call.1} parent=11 // pred_fallthru
          _
        // Predicated region
        $region17: #{tpu_custom_call.1} parent=11 // pred_check
          %p210 = pneg %p82
        $region18: #{tpu_custom_call.1} parent=11 // pred_check_branch
          %212 = sbr.rel (%p210) target = $region20
        $region19: #{tpu_custom_call.1} parent=11 // pred_region
          _
        $region20: #{tpu_custom_call.1} parent=11 // pred_fallthru
          _
        // Predicated region
        $region21: #{tpu_custom_call.1} parent=11 // pred_check
          %p213 = pneg %p103
        $region22: #{tpu_custom_call.1} parent=11 // pred_check_branch
          %215 = sbr.rel (%p213) target = $region24
        $region23: #{tpu_custom_call.1} parent=11 // pred_region
          _
        $region24: #{tpu_custom_call.1} parent=11 // pred_fallthru
          _
        // Predicated region
        $region25: #{tpu_custom_call.1} parent=11 // pred_check
          %p216 = pneg %p124
        $region26: #{tpu_custom_call.1} parent=11 // pred_check_branch
          %218 = sbr.rel (%p216) target = $region28
        $region27: #{tpu_custom_call.1} parent=11 // pred_region
          _
        $region28: #{tpu_custom_call.1} parent=11 // pred_fallthru
          _
        // Predicated region
        $region29: #{tpu_custom_call.1} parent=11 // pred_check
          %p219 = pneg %p145
        $region30: #{tpu_custom_call.1} parent=11 // pred_check_branch
          %221 = sbr.rel (%p219) target = $region32
        $region31: #{tpu_custom_call.1} parent=11 // pred_region
          _
        $region32: #{tpu_custom_call.1} parent=11 // pred_fallthru
          _
        // Predicated region
        $region33: #{tpu_custom_call.1} parent=11 // pred_check
          %p222 = pneg %p166
        $region34: #{tpu_custom_call.1} parent=11 // pred_check_branch
          %224 = sbr.rel (%p222) target = $region36
        $region35: #{tpu_custom_call.1} parent=11 // pred_region
          _
        $region36: #{tpu_custom_call.1} parent=11 // pred_fallthru
          _
      $region12: #{tpu_custom_call.1} parent=5 // pred_fallthru
        _
      %p225 = scmp.lt.s32.totalorder %s14, 2
      // Predicated region
      $region37: #{tpu_custom_call.1} parent=5 // pred_check
        %p226 = pneg %p225
      $region38: #{tpu_custom_call.1} parent=5 // pred_check_branch
        %228 = sbr.rel (%p226) target = $region40
      $region39: #{tpu_custom_call.1} parent=5 // pred_region
        // Predicated region
        $region41: #{tpu_custom_call.1} parent=39 // pred_check
          %p229 = pneg %p34
        $region42: #{tpu_custom_call.1} parent=39 // pred_check_branch
          %231 = sbr.rel (%p229) target = $region44
        $region43: #{tpu_custom_call.1} parent=39 // pred_region
          %s232 = smul.u32 16, %s14
          %s233 = ssub.s32 25, %s232
          %p234 = scmp.lt.s32.totalorder %s233, 16
          %s235 = scalar_select %p234, %s233, 16
          %s236 = smul.u32 8, %s235
          %p237 = scmp.lt.s32.totalorder %s232, 24
          %s238 = scalar_select %p237, %s232, 24
          %s239 = smul.addr %s238, 8
          %s240 = scalar_lea.vmem %s0, %s239
          %s241 = smul.u32 16, %s14
          %s242 = ssub.s32 25, %s241
          %p243 = scmp.lt.s32.totalorder %s242, 16
          %s244 = scalar_select %p243, %s242, 16
          %s245 = smul.u32 8, %s244
        $region44: #{tpu_custom_call.1} parent=39 // pred_fallthru
          _
      $region40: #{tpu_custom_call.1} parent=5 // pred_fallthru
        _
      %p246 = scmp.le.s32.totalorder 1, %s14
      %p247 = scmp.lt.s32.totalorder %s14, 3
      %p248 = pnand %p246, %p247
      %p249 = pneg %p248
      // Predicated region
      $region45: #{tpu_custom_call.1} parent=5 // pred_check
        _
      $region46: #{tpu_custom_call.1} parent=5 // pred_check_branch
        %251 = sbr.rel (%p248) target = $region48
      $region47: #{tpu_custom_call.1} parent=5 // pred_region
        %s252 = ssub.s32 %s14, 1
        %s253 = smul.u32 16, %s19
        %s254 = ssub.s32 25, %s253
        %p255 = scmp.lt.s32.totalorder %s254, 16
        %s256 = scalar_select %p255, %s254, 16
        %s257 = smul.u32 8, %s256
        %p258 = scmp.lt.s32.totalorder %s253, 24
        %s259 = scalar_select %p258, %s253, 24
        %s260 = smul.addr %s259, 8
        %s261 = scalar_lea.vmem %s0, %s260
        %p262 = pneg %p40
        %p263 = pneg %p37
        %p264 = pneg %p61
        %p265 = pneg %p58
        %p266 = pneg %p82
        %p267 = pneg %p79
        %p268 = pneg %p103
        %p269 = pneg %p100
        %p270 = pneg %p124
        %p271 = pneg %p121
        %p272 = pneg %p145
        %p273 = pneg %p142
        %p274 = pneg %p166
        %p275 = pneg %p163
        %p276 = pneg %p192
        %p277 = pneg %p189
        %s278 = sand.u32 %s179, 1
        %s279 = sand.u32 %s179, 1
        %s280 = smul.addr %s279, 128
        %s281 = scalar_lea.vmem [#allocation3], %s280
        %s282 = smul.u32 16, %s19
        %s283 = ssub.s32 25, %s282
        %p284 = scmp.lt.s32.totalorder %s283, 16
        %s285 = scalar_select %p284, %s283, 16
        %s286 = smul.u32 8, %s285
        %p287 = scmp.lt.s32.totalorder %s282, 24
        %s288 = scalar_select %p287, %s282, 24
        %s289 = smul.addr %s288, 8
        %s290 = scalar_lea.vmem %s0, %s289
        %s291 = smul.u32 16, %s19
        %s292 = ssub.s32 25, %s291
        %p293 = scmp.lt.s32.totalorder %s292, 16
        %s294 = scalar_select %p293, %s292, 16
        %s295 = smul.u32 8, %s294
        %s296 = smul.u32 16, %s19
        %s297 = ssub.s32 25, %s296
        %p298 = scmp.lt.s32.totalorder %s297, 16
        %s299 = scalar_select %p298, %s297, 16
        %s300 = smul.u32 8, %s299
        %v302 = vld [vmem:[%s290] sm:$0xff]
        %v303 = vld [vmem:[%s290 + $0x8] sm:$0xff]
        %v304 = vld [vmem:[%s290 + $0x10] sm:$0xff]
        %v305 = vld [vmem:[%s290 + $0x18] sm:$0xff]
        %v306 = vld [vmem:[%s290 + $0x20] sm:$0xff]
        %v307 = vld [vmem:[%s290 + $0x28] sm:$0xff]
        %v308 = vld [vmem:[%s290 + $0x30] sm:$0xff]
        %v309 = vld [vmem:[%s290 + $0x38] sm:$0xff]
        %v310 = vld [vmem:[%s290 + $0x40] sm:$0xff]
        %v311 = vld [vmem:[%s290 + $0x48] sm:$0xff]
        %v312 = vld [vmem:[%s290 + $0x50] sm:$0xff]
        %v313 = vld [vmem:[%s290 + $0x58] sm:$0xff]
        %v314 = vld [vmem:[%s290 + $0x60] sm:$0xff]
        %v315 = vld [vmem:[%s290 + $0x68] sm:$0xff]
        %v316 = vld [vmem:[%s290 + $0x70] sm:$0xff]
        %v317 = vld [vmem:[%s290 + $0x78] sm:$0xff]
        %v318 = vpack.c.bf16 %v303, %v302
        %v319 = vpack.c.bf16 %v305, %v304
        %v320 = vpack.c.bf16 %v307, %v306
        %v321 = vpack.c.bf16 %v309, %v308
        %v322 = vpack.c.bf16 %v311, %v310
        %v323 = vpack.c.bf16 %v313, %v312
        %v324 = vpack.c.bf16 %v315, %v314
        %v325 = vpack.c.bf16 %v317, %v316
        %v326 = vld [vmem:[%s1] sm:$0xf]
        %v327 = vld [vmem:[%s1 + $0x4] sm:$0xf]
        %v328 = vld [vmem:[%s1 + $0x8] sm:$0xf]
        %v329 = vld [vmem:[%s1 + $0xc] sm:$0xf]
        %v330 = vld [vmem:[%s2] sm:$0x1]
        %v332 = vperm.slane %v330, 0
        %v338 = vunpack.c.l.b16 %v326
        %v339 = vunpack.c.l.b16 %v327
        %v340 = vunpack.c.l.b16 %v328
        %v341 = vunpack.c.l.b16 %v329
        %v342 = vpack.c.b16 %v339, %v338
        %v343 = vpack.c.b16 %v341, %v340
        %vm346 = vcmask 261120
        %v348 = vsel %vm346, %v318, 0
        %v351 = vsel %vm346, %v319, 0
        %v354 = vsel %vm346, %v320, 0
        %v357 = vsel %vm346, %v321, 0
        %v360 = vsel %vm346, %v322, 0
        %v363 = vsel %vm346, %v323, 0
        %v366 = vsel %vm346, %v324, 0
        %v369 = vsel %vm346, %v325, 0
        %371 = vmatpush.bf16.msra.mxu0 0
        %372 = vmatpush.bf16.msra.mxu0 0
        %373 = vmatpush.bf16.msra.mxu0 0
        %374 = vmatpush.bf16.msra.mxu0 0
        %375 = vmatpush.bf16.msra.mxu0 0
        %376 = vmatpush.bf16.msra.mxu0 0
        %377 = vmatpush.bf16.msra.mxu0 %v343
        %378 = vmatpush.bf16.msra.mxu0 %v342
        %379 = vmatmul.bf16.gmra.mxu0 %v348
        %v380 = vpop.f32.mrf.mxu0
        %v381 = vadd.f32 %v332, %v380
        %v382 = vpop.f32.mrf.mxu0
        %v383 = vadd.f32 %v332, %v382
        %384 = vmatmul.bf16.gmra.mxu0 %v351
        %v385 = vpop.f32.mrf.mxu0
        %v386 = vadd.f32 %v332, %v385
        %v387 = vpop.f32.mrf.mxu0
        %v388 = vadd.f32 %v332, %v387
        %389 = vmatmul.bf16.gmra.mxu0 %v354
        %v390 = vpop.f32.mrf.mxu0
        %v391 = vadd.f32 %v332, %v390
        %v392 = vpop.f32.mrf.mxu0
        %v393 = vadd.f32 %v332, %v392
        %394 = vmatmul.bf16.gmra.mxu0 %v357
        %v395 = vpop.f32.mrf.mxu0
        %v396 = vadd.f32 %v332, %v395
        %v397 = vpop.f32.mrf.mxu0
        %v398 = vadd.f32 %v332, %v397
        %399 = vmatmul.bf16.gmra.mxu0 %v360
        %v400 = vpop.f32.mrf.mxu0
        %v401 = vadd.f32 %v332, %v400
        %v402 = vpop.f32.mrf.mxu0
        %v403 = vadd.f32 %v332, %v402
        %404 = vmatmul.bf16.gmra.mxu0 %v363
        %v405 = vpop.f32.mrf.mxu0
        %v406 = vadd.f32 %v332, %v405
        %v407 = vpop.f32.mrf.mxu0
        %v408 = vadd.f32 %v332, %v407
        %409 = vmatmul.bf16.gmra.mxu0 %v366
        %v410 = vpop.f32.mrf.mxu0
        %v411 = vadd.f32 %v332, %v410
        %v412 = vpop.f32.mrf.mxu0
        %v413 = vadd.f32 %v332, %v412
        %414 = vmatmul.bf16.gmra.mxu0 %v369
        %v415 = vpop.f32.mrf.mxu0
        %v416 = vadd.f32 %v332, %v415
        %v417 = vpop.f32.mrf.mxu0
        %v418 = vadd.f32 %v332, %v417
        %419 = vdwg.mxu0
        %v420 = vxor.u32 %v381, 2147483648
        %v421 = vxor.u32 %v383, 2147483648
        %v422 = vxor.u32 %v386, 2147483648
        %v423 = vxor.u32 %v388, 2147483648
        %v424 = vxor.u32 %v391, 2147483648
        %v425 = vxor.u32 %v393, 2147483648
        %v426 = vxor.u32 %v396, 2147483648
        %v427 = vxor.u32 %v398, 2147483648
        %v428 = vxor.u32 %v401, 2147483648
        %v429 = vxor.u32 %v403, 2147483648
        %v430 = vxor.u32 %v406, 2147483648
        %v431 = vxor.u32 %v408, 2147483648
        %v432 = vxor.u32 %v411, 2147483648
        %v433 = vxor.u32 %v413, 2147483648
        %v434 = vxor.u32 %v416, 2147483648
        %v435 = vxor.u32 %v418, 2147483648
        %v436 = vmul.f32 %v420, 1.442695
        %v437 = vpow.pop %v436
        %v438 = vmul.f32 %v421, 1.442695
        %v439 = vpow.pop %v438
        %v440 = vmul.f32 %v422, 1.442695
        %v441 = vpow.pop %v440
        %v442 = vmul.f32 %v423, 1.442695
        %v443 = vpow.pop %v442
        %v444 = vmul.f32 %v424, 1.442695
        %v445 = vpow.pop %v444
        %v446 = vmul.f32 %v425, 1.442695
        %v447 = vpow.pop %v446
        %v448 = vmul.f32 %v426, 1.442695
        %v449 = vpow.pop %v448
        %v450 = vmul.f32 %v427, 1.442695
        %v451 = vpow.pop %v450
        %v452 = vmul.f32 %v428, 1.442695
        %v453 = vpow.pop %v452
        %v454 = vmul.f32 %v429, 1.442695
        %v455 = vpow.pop %v454
        %v456 = vmul.f32 %v430, 1.442695
        %v457 = vpow.pop %v456
        %v458 = vmul.f32 %v431, 1.442695
        %v459 = vpow.pop %v458
        %v460 = vmul.f32 %v432, 1.442695
        %v461 = vpow.pop %v460
        %v462 = vmul.f32 %v433, 1.442695
        %v463 = vpow.pop %v462
        %v464 = vmul.f32 %v434, 1.442695
        %v465 = vpow.pop %v464
        %v466 = vmul.f32 %v435, 1.442695
        %v467 = vpow.pop %v466
        %v468 = vadd.f32 %v437, 1.0
        %v469 = vadd.f32 %v439, 1.0
        %v470 = vadd.f32 %v441, 1.0
        %v471 = vadd.f32 %v443, 1.0
        %v472 = vadd.f32 %v445, 1.0
        %v473 = vadd.f32 %v447, 1.0
        %v474 = vadd.f32 %v449, 1.0
        %v475 = vadd.f32 %v451, 1.0
        %v476 = vadd.f32 %v453, 1.0
        %v477 = vadd.f32 %v455, 1.0
        %v478 = vadd.f32 %v457, 1.0
        %v479 = vadd.f32 %v459, 1.0
        %v480 = vadd.f32 %v461, 1.0
        %v481 = vadd.f32 %v463, 1.0
        %v482 = vadd.f32 %v465, 1.0
        %v483 = vadd.f32 %v467, 1.0
        %v484 = vrcp.pop %v468
        %v485 = vmul.f32 %v468, %v484
        %v486 = vsub.f32 1.0, %v485
        %v487 = vmul.f32 %v484, %v486
        %v488 = vadd.f32 %v484, %v487
        %vm489 = vweird.f32 %v468
        %vm490 = vweird.f32 %v484
        %vm491 = vmor %vm489, %vm490
        %v492 = vsel %vm491, %v484, %v488
        %v493 = vand.u32 2147483647, %v468
        %vm494 = vcmp.eq.f32.partialorder %v493, 8.507059e+37
        %v495 = vand.u32 %v468, 2147483648
        %v496 = vor.u32 1.1754944e-38, %v495
        %v497 = vsel %vm494, %v496, %v492
        %v498 = vmul.f32 1.0, %v497
        %v499 = vrcp.pop %v469
        %v500 = vmul.f32 %v469, %v499
        %v501 = vsub.f32 1.0, %v500
        %v502 = vmul.f32 %v499, %v501
        %v503 = vadd.f32 %v499, %v502
        %vm504 = vweird.f32 %v469
        %vm505 = vweird.f32 %v499
        %vm506 = vmor %vm504, %vm505
        %v507 = vsel %vm506, %v499, %v503
        %v508 = vand.u32 2147483647, %v469
        %vm509 = vcmp.eq.f32.partialorder %v508, 8.507059e+37
        %v510 = vand.u32 %v469, 2147483648
        %v511 = vor.u32 1.1754944e-38, %v510
        %v512 = vsel %vm509, %v511, %v507
        %v513 = vmul.f32 1.0, %v512
        %v514 = vrcp.pop %v470
        %v515 = vmul.f32 %v470, %v514
        %v516 = vsub.f32 1.0, %v515
        %v517 = vmul.f32 %v514, %v516
        %v518 = vadd.f32 %v514, %v517
        %vm519 = vweird.f32 %v470
        %vm520 = vweird.f32 %v514
        %vm521 = vmor %vm519, %vm520
        %v522 = vsel %vm521, %v514, %v518
        %v523 = vand.u32 2147483647, %v470
        %vm524 = vcmp.eq.f32.partialorder %v523, 8.507059e+37
        %v525 = vand.u32 %v470, 2147483648
        %v526 = vor.u32 1.1754944e-38, %v525
        %v527 = vsel %vm524, %v526, %v522
        %v528 = vmul.f32 1.0, %v527
        %v529 = vrcp.pop %v471
        %v530 = vmul.f32 %v471, %v529
        %v531 = vsub.f32 1.0, %v530
        %v532 = vmul.f32 %v529, %v531
        %v533 = vadd.f32 %v529, %v532
        %vm534 = vweird.f32 %v471
        %vm535 = vweird.f32 %v529
        %vm536 = vmor %vm534, %vm535
        %v537 = vsel %vm536, %v529, %v533
        %v538 = vand.u32 2147483647, %v471
        %vm539 = vcmp.eq.f32.partialorder %v538, 8.507059e+37
        %v540 = vand.u32 %v471, 2147483648
        %v541 = vor.u32 1.1754944e-38, %v540
        %v542 = vsel %vm539, %v541, %v537
        %v543 = vmul.f32 1.0, %v542
        %v544 = vrcp.pop %v472
        %v545 = vmul.f32 %v472, %v544
        %v546 = vsub.f32 1.0, %v545
        %v547 = vmul.f32 %v544, %v546
        %v548 = vadd.f32 %v544, %v547
        %vm549 = vweird.f32 %v472
        %vm550 = vweird.f32 %v544
        %vm551 = vmor %vm549, %vm550
        %v552 = vsel %vm551, %v544, %v548
        %v553 = vand.u32 2147483647, %v472
        %vm554 = vcmp.eq.f32.partialorder %v553, 8.507059e+37
        %v555 = vand.u32 %v472, 2147483648
        %v556 = vor.u32 1.1754944e-38, %v555
        %v557 = vsel %vm554, %v556, %v552
        %v558 = vmul.f32 1.0, %v557
        %v559 = vrcp.pop %v473
        %v560 = vmul.f32 %v473, %v559
        %v561 = vsub.f32 1.0, %v560
        %v562 = vmul.f32 %v559, %v561
        %v563 = vadd.f32 %v559, %v562
        %vm564 = vweird.f32 %v473
        %vm565 = vweird.f32 %v559
        %vm566 = vmor %vm564, %vm565
        %v567 = vsel %vm566, %v559, %v563
        %v568 = vand.u32 2147483647, %v473
        %vm569 = vcmp.eq.f32.partialorder %v568, 8.507059e+37
        %v570 = vand.u32 %v473, 2147483648
        %v571 = vor.u32 1.1754944e-38, %v570
        %v572 = vsel %vm569, %v571, %v567
        %v573 = vmul.f32 1.0, %v572
        %v574 = vrcp.pop %v474
        %v575 = vmul.f32 %v474, %v574
        %v576 = vsub.f32 1.0, %v575
        %v577 = vmul.f32 %v574, %v576
        %v578 = vadd.f32 %v574, %v577
        %vm579 = vweird.f32 %v474
        %vm580 = vweird.f32 %v574
        %vm581 = vmor %vm579, %vm580
        %v582 = vsel %vm581, %v574, %v578
        %v583 = vand.u32 2147483647, %v474
        %vm584 = vcmp.eq.f32.partialorder %v583, 8.507059e+37
        %v585 = vand.u32 %v474, 2147483648
        %v586 = vor.u32 1.1754944e-38, %v585
        %v587 = vsel %vm584, %v586, %v582
        %v588 = vmul.f32 1.0, %v587
        %v589 = vrcp.pop %v475
        %v590 = vmul.f32 %v475, %v589
        %v591 = vsub.f32 1.0, %v590
        %v592 = vmul.f32 %v589, %v591
        %v593 = vadd.f32 %v589, %v592
        %vm594 = vweird.f32 %v475
        %vm595 = vweird.f32 %v589
        %vm596 = vmor %vm594, %vm595
        %v597 = vsel %vm596, %v589, %v593
        %v598 = vand.u32 2147483647, %v475
        %vm599 = vcmp.eq.f32.partialorder %v598, 8.507059e+37
        %v600 = vand.u32 %v475, 2147483648
        %v601 = vor.u32 1.1754944e-38, %v600
        %v602 = vsel %vm599, %v601, %v597
        %v603 = vmul.f32 1.0, %v602
        %v604 = vrcp.pop %v476
        %v605 = vmul.f32 %v476, %v604
        %v606 = vsub.f32 1.0, %v605
        %v607 = vmul.f32 %v604, %v606
        %v608 = vadd.f32 %v604, %v607
        %vm609 = vweird.f32 %v476
        %vm610 = vweird.f32 %v604
        %vm611 = vmor %vm609, %vm610
        %v612 = vsel %vm611, %v604, %v608
        %v613 = vand.u32 2147483647, %v476
        %vm614 = vcmp.eq.f32.partialorder %v613, 8.507059e+37
        %v615 = vand.u32 %v476, 2147483648
        %v616 = vor.u32 1.1754944e-38, %v615
        %v617 = vsel %vm614, %v616, %v612
        %v618 = vmul.f32 1.0, %v617
        %v619 = vrcp.pop %v477
        %v620 = vmul.f32 %v477, %v619
        %v621 = vsub.f32 1.0, %v620
        %v622 = vmul.f32 %v619, %v621
        %v623 = vadd.f32 %v619, %v622
        %vm624 = vweird.f32 %v477
        %vm625 = vweird.f32 %v619
        %vm626 = vmor %vm624, %vm625
        %v627 = vsel %vm626, %v619, %v623
        %v628 = vand.u32 2147483647, %v477
        %vm629 = vcmp.eq.f32.partialorder %v628, 8.507059e+37
        %v630 = vand.u32 %v477, 2147483648
        %v631 = vor.u32 1.1754944e-38, %v630
        %v632 = vsel %vm629, %v631, %v627
        %v633 = vmul.f32 1.0, %v632
        %v634 = vrcp.pop %v478
        %v635 = vmul.f32 %v478, %v634
        %v636 = vsub.f32 1.0, %v635
        %v637 = vmul.f32 %v634, %v636
        %v638 = vadd.f32 %v634, %v637
        %vm639 = vweird.f32 %v478
        %vm640 = vweird.f32 %v634
        %vm641 = vmor %vm639, %vm640
        %v642 = vsel %vm641, %v634, %v638
        %v643 = vand.u32 2147483647, %v478
        %vm644 = vcmp.eq.f32.partialorder %v643, 8.507059e+37
        %v645 = vand.u32 %v478, 2147483648
        %v646 = vor.u32 1.1754944e-38, %v645
        %v647 = vsel %vm644, %v646, %v642
        %v648 = vmul.f32 1.0, %v647
        %v649 = vrcp.pop %v479
        %v650 = vmul.f32 %v479, %v649
        %v651 = vsub.f32 1.0, %v650
        %v652 = vmul.f32 %v649, %v651
        %v653 = vadd.f32 %v649, %v652
        %vm654 = vweird.f32 %v479
        %vm655 = vweird.f32 %v649
        %vm656 = vmor %vm654, %vm655
        %v657 = vsel %vm656, %v649, %v653
        %v658 = vand.u32 2147483647, %v479
        %vm659 = vcmp.eq.f32.partialorder %v658, 8.507059e+37
        %v660 = vand.u32 %v479, 2147483648
        %v661 = vor.u32 1.1754944e-38, %v660
        %v662 = vsel %vm659, %v661, %v657
        %v663 = vmul.f32 1.0, %v662
        %v664 = vrcp.pop %v480
        %v665 = vmul.f32 %v480, %v664
        %v666 = vsub.f32 1.0, %v665
        %v667 = vmul.f32 %v664, %v666
        %v668 = vadd.f32 %v664, %v667
        %vm669 = vweird.f32 %v480
        %vm670 = vweird.f32 %v664
        %vm671 = vmor %vm669, %vm670
        %v672 = vsel %vm671, %v664, %v668
        %v673 = vand.u32 2147483647, %v480
        %vm674 = vcmp.eq.f32.partialorder %v673, 8.507059e+37
        %v675 = vand.u32 %v480, 2147483648
        %v676 = vor.u32 1.1754944e-38, %v675
        %v677 = vsel %vm674, %v676, %v672
        %v678 = vmul.f32 1.0, %v677
        %v679 = vrcp.pop %v481
        %v680 = vmul.f32 %v481, %v679
        %v681 = vsub.f32 1.0, %v680
        %v682 = vmul.f32 %v679, %v681
        %v683 = vadd.f32 %v679, %v682
        %vm684 = vweird.f32 %v481
        %vm685 = vweird.f32 %v679
        %vm686 = vmor %vm684, %vm685
        %v687 = vsel %vm686, %v679, %v683
        %v688 = vand.u32 2147483647, %v481
        %vm689 = vcmp.eq.f32.partialorder %v688, 8.507059e+37
        %v690 = vand.u32 %v481, 2147483648
        %v691 = vor.u32 1.1754944e-38, %v690
        %v692 = vsel %vm689, %v691, %v687
        %v693 = vmul.f32 1.0, %v692
        %v694 = vrcp.pop %v482
        %v695 = vmul.f32 %v482, %v694
        %v696 = vsub.f32 1.0, %v695
        %v697 = vmul.f32 %v694, %v696
        %v698 = vadd.f32 %v694, %v697
        %vm699 = vweird.f32 %v482
        %vm700 = vweird.f32 %v694
        %vm701 = vmor %vm699, %vm700
        %v702 = vsel %vm701, %v694, %v698
        %v703 = vand.u32 2147483647, %v482
        %vm704 = vcmp.eq.f32.partialorder %v703, 8.507059e+37
        %v705 = vand.u32 %v482, 2147483648
        %v706 = vor.u32 1.1754944e-38, %v705
        %v707 = vsel %vm704, %v706, %v702
        %v708 = vmul.f32 1.0, %v707
        %v709 = vrcp.pop %v483
        %v710 = vmul.f32 %v483, %v709
        %v711 = vsub.f32 1.0, %v710
        %v712 = vmul.f32 %v709, %v711
        %v713 = vadd.f32 %v709, %v712
        %vm714 = vweird.f32 %v483
        %vm715 = vweird.f32 %v709
        %vm716 = vmor %vm714, %vm715
        %v717 = vsel %vm716, %v709, %v713
        %v718 = vand.u32 2147483647, %v483
        %vm719 = vcmp.eq.f32.partialorder %v718, 8.507059e+37
        %v720 = vand.u32 %v483, 2147483648
        %v721 = vor.u32 1.1754944e-38, %v720
        %v722 = vsel %vm719, %v721, %v717
        %v723 = vmul.f32 1.0, %v722
        %v724 = vmul.f32 %v381, %v498
        %v725 = vmul.f32 %v383, %v513
        %v726 = vmul.f32 %v386, %v528
        %v727 = vmul.f32 %v388, %v543
        %v728 = vmul.f32 %v391, %v558
        %v729 = vmul.f32 %v393, %v573
        %v730 = vmul.f32 %v396, %v588
        %v731 = vmul.f32 %v398, %v603
        %v732 = vmul.f32 %v401, %v618
        %v733 = vmul.f32 %v403, %v633
        %v734 = vmul.f32 %v406, %v648
        %v735 = vmul.f32 %v408, %v663
        %v736 = vmul.f32 %v411, %v678
        %v737 = vmul.f32 %v413, %v693
        %v738 = vmul.f32 %v416, %v708
        %v739 = vmul.f32 %v418, %v723
        %v740 = vpack.c.bf16 %v725, %v724
        %v741 = vpack.c.bf16 %v727, %v726
        %v742 = vpack.c.bf16 %v729, %v728
        %v743 = vpack.c.bf16 %v731, %v730
        %v744 = vpack.c.bf16 %v733, %v732
        %v745 = vpack.c.bf16 %v735, %v734
        %v746 = vpack.c.bf16 %v737, %v736
        %v747 = vpack.c.bf16 %v739, %v738
        %v748 = vld [vmem:[%s3] sm:$0xf]
        %v749 = vld [vmem:[%s3 + $0x4] sm:$0xf]
        %v750 = vld [vmem:[%s3 + $0x8] sm:$0xf]
        %v751 = vld [vmem:[%s3 + $0xc] sm:$0xf]
        %v752 = vld [vmem:[%s3 + $0x10] sm:$0xf]
        %v753 = vld [vmem:[%s3 + $0x14] sm:$0xf]
        %v754 = vld [vmem:[%s3 + $0x18] sm:$0xf]
        %v755 = vld [vmem:[%s3 + $0x1c] sm:$0xf]
        %v756 = vld [vmem:[%s3 + $0x20] sm:$0xf]
        %v757 = vld [vmem:[%s3 + $0x24] sm:$0xf]
        %v758 = vld [vmem:[%s3 + $0x28] sm:$0xf]
        %v759 = vld [vmem:[%s3 + $0x2c] sm:$0xf]
        %v760 = vld [vmem:[%s3 + $0x30] sm:$0xf]
        %v761 = vld [vmem:[%s3 + $0x34] sm:$0xf]
        %v762 = vld [vmem:[%s3 + $0x38] sm:$0xf]
        %v763 = vld [vmem:[%s3 + $0x3c] sm:$0xf]
        %v764 = vld [vmem:[%s4] sm:$0x1]
        %v766 = vperm.slane %v764, 0
        %v784 = vunpack.c.l.b16 %v748
        %v785 = vunpack.c.l.b16 %v749
        %v786 = vunpack.c.l.b16 %v750
        %v787 = vunpack.c.l.b16 %v751
        %v788 = vunpack.c.l.b16 %v752
        %v789 = vunpack.c.l.b16 %v753
        %v790 = vunpack.c.l.b16 %v754
        %v791 = vunpack.c.l.b16 %v755
        %v792 = vunpack.c.l.b16 %v756
        %v793 = vunpack.c.l.b16 %v757
        %v794 = vunpack.c.l.b16 %v758
        %v795 = vunpack.c.l.b16 %v759
        %v796 = vunpack.c.l.b16 %v760
        %v797 = vunpack.c.l.b16 %v761
        %v798 = vunpack.c.l.b16 %v762
        %v799 = vunpack.c.l.b16 %v763
        %v800 = vpack.c.b16 %v785, %v784
        %v801 = vpack.c.b16 %v787, %v786
        %v802 = vpack.c.b16 %v789, %v788
        %v803 = vpack.c.b16 %v791, %v790
        %v804 = vpack.c.b16 %v793, %v792
        %v805 = vpack.c.b16 %v795, %v794
        %v806 = vpack.c.b16 %v797, %v796
        %v807 = vpack.c.b16 %v799, %v798
        %816 = vmatpush.bf16.msra.mxu0 %v807
        %817 = vmatpush.bf16.msra.mxu0 %v806
        %818 = vmatpush.bf16.msra.mxu0 %v805
        %819 = vmatpush.bf16.msra.mxu0 %v804
        %820 = vmatpush.bf16.msra.mxu0 %v803
        %821 = vmatpush.bf16.msra.mxu0 %v802
        %822 = vmatpush.bf16.msra.mxu0 %v801
        %823 = vmatpush.bf16.msra.mxu0 %v800
        %824 = vmatmul.bf16.gmra.mxu0 %v740
        %v825 = vpop.f32.mrf.mxu0
        %v826 = vadd.f32 %v766, %v825
        %v827 = vpop.f32.mrf.mxu0
        %v828 = vadd.f32 %v766, %v827
        %829 = vmatmul.bf16.gmra.mxu0 %v741
        %v830 = vpop.f32.mrf.mxu0
        %v831 = vadd.f32 %v766, %v830
        %v832 = vpop.f32.mrf.mxu0
        %v833 = vadd.f32 %v766, %v832
        %834 = vmatmul.bf16.gmra.mxu0 %v742
        %v835 = vpop.f32.mrf.mxu0
        %v836 = vadd.f32 %v766, %v835
        %v837 = vpop.f32.mrf.mxu0
        %v838 = vadd.f32 %v766, %v837
        %839 = vmatmul.bf16.gmra.mxu0 %v743
        %v840 = vpop.f32.mrf.mxu0
        %v841 = vadd.f32 %v766, %v840
        %v842 = vpop.f32.mrf.mxu0
        %v843 = vadd.f32 %v766, %v842
        %844 = vmatmul.bf16.gmra.mxu0 %v744
        %v845 = vpop.f32.mrf.mxu0
        %v846 = vadd.f32 %v766, %v845
        %v847 = vpop.f32.mrf.mxu0
        %v848 = vadd.f32 %v766, %v847
        %849 = vmatmul.bf16.gmra.mxu0 %v745
        %v850 = vpop.f32.mrf.mxu0
        %v851 = vadd.f32 %v766, %v850
        %v852 = vpop.f32.mrf.mxu0
        %v853 = vadd.f32 %v766, %v852
        %854 = vmatmul.bf16.gmra.mxu0 %v746
        %v855 = vpop.f32.mrf.mxu0
        %v856 = vadd.f32 %v766, %v855
        %v857 = vpop.f32.mrf.mxu0
        %v858 = vadd.f32 %v766, %v857
        %859 = vmatmul.bf16.gmra.mxu0 %v747
        %v860 = vpop.f32.mrf.mxu0
        %v861 = vadd.f32 %v766, %v860
        %v862 = vpop.f32.mrf.mxu0
        %v863 = vadd.f32 %v766, %v862
        %864 = vdwg.mxu0
        %v865 = vxor.u32 %v826, 2147483648
        %v866 = vxor.u32 %v828, 2147483648
        %v867 = vxor.u32 %v831, 2147483648
        %v868 = vxor.u32 %v833, 2147483648
        %v869 = vxor.u32 %v836, 2147483648
        %v870 = vxor.u32 %v838, 2147483648
        %v871 = vxor.u32 %v841, 2147483648
        %v872 = vxor.u32 %v843, 2147483648
        %v873 = vxor.u32 %v846, 2147483648
        %v874 = vxor.u32 %v848, 2147483648
        %v875 = vxor.u32 %v851, 2147483648
        %v876 = vxor.u32 %v853, 2147483648
        %v877 = vxor.u32 %v856, 2147483648
        %v878 = vxor.u32 %v858, 2147483648
        %v879 = vxor.u32 %v861, 2147483648
        %v880 = vxor.u32 %v863, 2147483648
        %v881 = vmul.f32 %v865, 1.442695
        %v882 = vpow.pop %v881
        %v883 = vmul.f32 %v866, 1.442695
        %v884 = vpow.pop %v883
        %v885 = vmul.f32 %v867, 1.442695
        %v886 = vpow.pop %v885
        %v887 = vmul.f32 %v868, 1.442695
        %v888 = vpow.pop %v887
        %v889 = vmul.f32 %v869, 1.442695
        %v890 = vpow.pop %v889
        %v891 = vmul.f32 %v870, 1.442695
        %v892 = vpow.pop %v891
        %v893 = vmul.f32 %v871, 1.442695
        %v894 = vpow.pop %v893
        %v895 = vmul.f32 %v872, 1.442695
        %v896 = vpow.pop %v895
        %v897 = vmul.f32 %v873, 1.442695
        %v898 = vpow.pop %v897
        %v899 = vmul.f32 %v874, 1.442695
        %v900 = vpow.pop %v899
        %v901 = vmul.f32 %v875, 1.442695
        %v902 = vpow.pop %v901
        %v903 = vmul.f32 %v876, 1.442695
        %v904 = vpow.pop %v903
        %v905 = vmul.f32 %v877, 1.442695
        %v906 = vpow.pop %v905
        %v907 = vmul.f32 %v878, 1.442695
        %v908 = vpow.pop %v907
        %v909 = vmul.f32 %v879, 1.442695
        %v910 = vpow.pop %v909
        %v911 = vmul.f32 %v880, 1.442695
        %v912 = vpow.pop %v911
        %v913 = vadd.f32 %v882, 1.0
        %v914 = vadd.f32 %v884, 1.0
        %v915 = vadd.f32 %v886, 1.0
        %v916 = vadd.f32 %v888, 1.0
        %v917 = vadd.f32 %v890, 1.0
        %v918 = vadd.f32 %v892, 1.0
        %v919 = vadd.f32 %v894, 1.0
        %v920 = vadd.f32 %v896, 1.0
        %v921 = vadd.f32 %v898, 1.0
        %v922 = vadd.f32 %v900, 1.0
        %v923 = vadd.f32 %v902, 1.0
        %v924 = vadd.f32 %v904, 1.0
        %v925 = vadd.f32 %v906, 1.0
        %v926 = vadd.f32 %v908, 1.0
        %v927 = vadd.f32 %v910, 1.0
        %v928 = vadd.f32 %v912, 1.0
        %v929 = vrcp.pop %v913
        %v930 = vmul.f32 %v913, %v929
        %v931 = vsub.f32 1.0, %v930
        %v932 = vmul.f32 %v929, %v931
        %v933 = vadd.f32 %v929, %v932
        %vm934 = vweird.f32 %v913
        %vm935 = vweird.f32 %v929
        %vm936 = vmor %vm934, %vm935
        %v937 = vsel %vm936, %v929, %v933
        %v938 = vand.u32 2147483647, %v913
        %vm939 = vcmp.eq.f32.partialorder %v938, 8.507059e+37
        %v940 = vand.u32 %v913, 2147483648
        %v941 = vor.u32 1.1754944e-38, %v940
        %v942 = vsel %vm939, %v941, %v937
        %v943 = vmul.f32 1.0, %v942
        %v944 = vrcp.pop %v914
        %v945 = vmul.f32 %v914, %v944
        %v946 = vsub.f32 1.0, %v945
        %v947 = vmul.f32 %v944, %v946
        %v948 = vadd.f32 %v944, %v947
        %vm949 = vweird.f32 %v914
        %vm950 = vweird.f32 %v944
        %vm951 = vmor %vm949, %vm950
        %v952 = vsel %vm951, %v944, %v948
        %v953 = vand.u32 2147483647, %v914
        %vm954 = vcmp.eq.f32.partialorder %v953, 8.507059e+37
        %v955 = vand.u32 %v914, 2147483648
        %v956 = vor.u32 1.1754944e-38, %v955
        %v957 = vsel %vm954, %v956, %v952
        %v958 = vmul.f32 1.0, %v957
        %v959 = vrcp.pop %v915
        %v960 = vmul.f32 %v915, %v959
        %v961 = vsub.f32 1.0, %v960
        %v962 = vmul.f32 %v959, %v961
        %v963 = vadd.f32 %v959, %v962
        %vm964 = vweird.f32 %v915
        %vm965 = vweird.f32 %v959
        %vm966 = vmor %vm964, %vm965
        %v967 = vsel %vm966, %v959, %v963
        %v968 = vand.u32 2147483647, %v915
        %vm969 = vcmp.eq.f32.partialorder %v968, 8.507059e+37
        %v970 = vand.u32 %v915, 2147483648
        %v971 = vor.u32 1.1754944e-38, %v970
        %v972 = vsel %vm969, %v971, %v967
        %v973 = vmul.f32 1.0, %v972
        %v974 = vrcp.pop %v916
        %v975 = vmul.f32 %v916, %v974
        %v976 = vsub.f32 1.0, %v975
        %v977 = vmul.f32 %v974, %v976
        %v978 = vadd.f32 %v974, %v977
        %vm979 = vweird.f32 %v916
        %vm980 = vweird.f32 %v974
        %vm981 = vmor %vm979, %vm980
        %v982 = vsel %vm981, %v974, %v978
        %v983 = vand.u32 2147483647, %v916
        %vm984 = vcmp.eq.f32.partialorder %v983, 8.507059e+37
        %v985 = vand.u32 %v916, 2147483648
        %v986 = vor.u32 1.1754944e-38, %v985
        %v987 = vsel %vm984, %v986, %v982
        %v988 = vmul.f32 1.0, %v987
        %v989 = vrcp.pop %v917
        %v990 = vmul.f32 %v917, %v989
        %v991 = vsub.f32 1.0, %v990
        %v992 = vmul.f32 %v989, %v991
        %v993 = vadd.f32 %v989, %v992
        %vm994 = vweird.f32 %v917
        %vm995 = vweird.f32 %v989
        %vm996 = vmor %vm994, %vm995
        %v997 = vsel %vm996, %v989, %v993
        %v998 = vand.u32 2147483647, %v917
        %vm999 = vcmp.eq.f32.partialorder %v998, 8.507059e+37
        %v1000 = vand.u32 %v917, 2147483648
        %v1001 = vor.u32 1.1754944e-38, %v1000
        %v1002 = vsel %vm999, %v1001, %v997
        %v1003 = vmul.f32 1.0, %v1002
        %v1004 = vrcp.pop %v918
        %v1005 = vmul.f32 %v918, %v1004
        %v1006 = vsub.f32 1.0, %v1005
        %v1007 = vmul.f32 %v1004, %v1006
        %v1008 = vadd.f32 %v1004, %v1007
        %vm1009 = vweird.f32 %v918
        %vm1010 = vweird.f32 %v1004
        %vm1011 = vmor %vm1009, %vm1010
        %v1012 = vsel %vm1011, %v1004, %v1008
        %v1013 = vand.u32 2147483647, %v918
        %vm1014 = vcmp.eq.f32.partialorder %v1013, 8.507059e+37
        %v1015 = vand.u32 %v918, 2147483648
        %v1016 = vor.u32 1.1754944e-38, %v1015
        %v1017 = vsel %vm1014, %v1016, %v1012
        %v1018 = vmul.f32 1.0, %v1017
        %v1019 = vrcp.pop %v919
        %v1020 = vmul.f32 %v919, %v1019
        %v1021 = vsub.f32 1.0, %v1020
        %v1022 = vmul.f32 %v1019, %v1021
        %v1023 = vadd.f32 %v1019, %v1022
        %vm1024 = vweird.f32 %v919
        %vm1025 = vweird.f32 %v1019
        %vm1026 = vmor %vm1024, %vm1025
        %v1027 = vsel %vm1026, %v1019, %v1023
        %v1028 = vand.u32 2147483647, %v919
        %vm1029 = vcmp.eq.f32.partialorder %v1028, 8.507059e+37
        %v1030 = vand.u32 %v919, 2147483648
        %v1031 = vor.u32 1.1754944e-38, %v1030
        %v1032 = vsel %vm1029, %v1031, %v1027
        %v1033 = vmul.f32 1.0, %v1032
        %v1034 = vrcp.pop %v920
        %v1035 = vmul.f32 %v920, %v1034
        %v1036 = vsub.f32 1.0, %v1035
        %v1037 = vmul.f32 %v1034, %v1036
        %v1038 = vadd.f32 %v1034, %v1037
        %vm1039 = vweird.f32 %v920
        %vm1040 = vweird.f32 %v1034
        %vm1041 = vmor %vm1039, %vm1040
        %v1042 = vsel %vm1041, %v1034, %v1038
        %v1043 = vand.u32 2147483647, %v920
        %vm1044 = vcmp.eq.f32.partialorder %v1043, 8.507059e+37
        %v1045 = vand.u32 %v920, 2147483648
        %v1046 = vor.u32 1.1754944e-38, %v1045
        %v1047 = vsel %vm1044, %v1046, %v1042
        %v1048 = vmul.f32 1.0, %v1047
        %v1049 = vrcp.pop %v921
        %v1050 = vmul.f32 %v921, %v1049
        %v1051 = vsub.f32 1.0, %v1050
        %v1052 = vmul.f32 %v1049, %v1051
        %v1053 = vadd.f32 %v1049, %v1052
        %vm1054 = vweird.f32 %v921
        %vm1055 = vweird.f32 %v1049
        %vm1056 = vmor %vm1054, %vm1055
        %v1057 = vsel %vm1056, %v1049, %v1053
        %v1058 = vand.u32 2147483647, %v921
        %vm1059 = vcmp.eq.f32.partialorder %v1058, 8.507059e+37
        %v1060 = vand.u32 %v921, 2147483648
        %v1061 = vor.u32 1.1754944e-38, %v1060
        %v1062 = vsel %vm1059, %v1061, %v1057
        %v1063 = vmul.f32 1.0, %v1062
        %v1064 = vrcp.pop %v922
        %v1065 = vmul.f32 %v922, %v1064
        %v1066 = vsub.f32 1.0, %v1065
        %v1067 = vmul.f32 %v1064, %v1066
        %v1068 = vadd.f32 %v1064, %v1067
        %vm1069 = vweird.f32 %v922
        %vm1070 = vweird.f32 %v1064
        %vm1071 = vmor %vm1069, %vm1070
        %v1072 = vsel %vm1071, %v1064, %v1068
        %v1073 = vand.u32 2147483647, %v922
        %vm1074 = vcmp.eq.f32.partialorder %v1073, 8.507059e+37
        %v1075 = vand.u32 %v922, 2147483648
        %v1076 = vor.u32 1.1754944e-38, %v1075
        %v1077 = vsel %vm1074, %v1076, %v1072
        %v1078 = vmul.f32 1.0, %v1077
        %v1079 = vrcp.pop %v923
        %v1080 = vmul.f32 %v923, %v1079
        %v1081 = vsub.f32 1.0, %v1080
        %v1082 = vmul.f32 %v1079, %v1081
        %v1083 = vadd.f32 %v1079, %v1082
        %vm1084 = vweird.f32 %v923
        %vm1085 = vweird.f32 %v1079
        %vm1086 = vmor %vm1084, %vm1085
        %v1087 = vsel %vm1086, %v1079, %v1083
        %v1088 = vand.u32 2147483647, %v923
        %vm1089 = vcmp.eq.f32.partialorder %v1088, 8.507059e+37
        %v1090 = vand.u32 %v923, 2147483648
        %v1091 = vor.u32 1.1754944e-38, %v1090
        %v1092 = vsel %vm1089, %v1091, %v1087
        %v1093 = vmul.f32 1.0, %v1092
        %v1094 = vrcp.pop %v924
        %v1095 = vmul.f32 %v924, %v1094
        %v1096 = vsub.f32 1.0, %v1095
        %v1097 = vmul.f32 %v1094, %v1096
        %v1098 = vadd.f32 %v1094, %v1097
        %vm1099 = vweird.f32 %v924
        %vm1100 = vweird.f32 %v1094
        %vm1101 = vmor %vm1099, %vm1100
        %v1102 = vsel %vm1101, %v1094, %v1098
        %v1103 = vand.u32 2147483647, %v924
        %vm1104 = vcmp.eq.f32.partialorder %v1103, 8.507059e+37
        %v1105 = vand.u32 %v924, 2147483648
        %v1106 = vor.u32 1.1754944e-38, %v1105
        %v1107 = vsel %vm1104, %v1106, %v1102
        %v1108 = vmul.f32 1.0, %v1107
        %v1109 = vrcp.pop %v925
        %v1110 = vmul.f32 %v925, %v1109
        %v1111 = vsub.f32 1.0, %v1110
        %v1112 = vmul.f32 %v1109, %v1111
        %v1113 = vadd.f32 %v1109, %v1112
        %vm1114 = vweird.f32 %v925
        %vm1115 = vweird.f32 %v1109
        %vm1116 = vmor %vm1114, %vm1115
        %v1117 = vsel %vm1116, %v1109, %v1113
        %v1118 = vand.u32 2147483647, %v925
        %vm1119 = vcmp.eq.f32.partialorder %v1118, 8.507059e+37
        %v1120 = vand.u32 %v925, 2147483648
        %v1121 = vor.u32 1.1754944e-38, %v1120
        %v1122 = vsel %vm1119, %v1121, %v1117
        %v1123 = vmul.f32 1.0, %v1122
        %v1124 = vrcp.pop %v926
        %v1125 = vmul.f32 %v926, %v1124
        %v1126 = vsub.f32 1.0, %v1125
        %v1127 = vmul.f32 %v1124, %v1126
        %v1128 = vadd.f32 %v1124, %v1127
        %vm1129 = vweird.f32 %v926
        %vm1130 = vweird.f32 %v1124
        %vm1131 = vmor %vm1129, %vm1130
        %v1132 = vsel %vm1131, %v1124, %v1128
        %v1133 = vand.u32 2147483647, %v926
        %vm1134 = vcmp.eq.f32.partialorder %v1133, 8.507059e+37
        %v1135 = vand.u32 %v926, 2147483648
        %v1136 = vor.u32 1.1754944e-38, %v1135
        %v1137 = vsel %vm1134, %v1136, %v1132
        %v1138 = vmul.f32 1.0, %v1137
        %v1139 = vrcp.pop %v927
        %v1140 = vmul.f32 %v927, %v1139
        %v1141 = vsub.f32 1.0, %v1140
        %v1142 = vmul.f32 %v1139, %v1141
        %v1143 = vadd.f32 %v1139, %v1142
        %vm1144 = vweird.f32 %v927
        %vm1145 = vweird.f32 %v1139
        %vm1146 = vmor %vm1144, %vm1145
        %v1147 = vsel %vm1146, %v1139, %v1143
        %v1148 = vand.u32 2147483647, %v927
        %vm1149 = vcmp.eq.f32.partialorder %v1148, 8.507059e+37
        %v1150 = vand.u32 %v927, 2147483648
        %v1151 = vor.u32 1.1754944e-38, %v1150
        %v1152 = vsel %vm1149, %v1151, %v1147
        %v1153 = vmul.f32 1.0, %v1152
        %v1154 = vrcp.pop %v928
        %v1155 = vmul.f32 %v928, %v1154
        %v1156 = vsub.f32 1.0, %v1155
        %v1157 = vmul.f32 %v1154, %v1156
        %v1158 = vadd.f32 %v1154, %v1157
        %vm1159 = vweird.f32 %v928
        %vm1160 = vweird.f32 %v1154
        %vm1161 = vmor %vm1159, %vm1160
        %v1162 = vsel %vm1161, %v1154, %v1158
        %v1163 = vand.u32 2147483647, %v928
        %vm1164 = vcmp.eq.f32.partialorder %v1163, 8.507059e+37
        %v1165 = vand.u32 %v928, 2147483648
        %v1166 = vor.u32 1.1754944e-38, %v1165
        %v1167 = vsel %vm1164, %v1166, %v1162
        %v1168 = vmul.f32 1.0, %v1167
        %v1169 = vmul.f32 %v826, %v943
        %v1170 = vmul.f32 %v828, %v958
        %v1171 = vmul.f32 %v831, %v973
        %v1172 = vmul.f32 %v833, %v988
        %v1173 = vmul.f32 %v836, %v1003
        %v1174 = vmul.f32 %v838, %v1018
        %v1175 = vmul.f32 %v841, %v1033
        %v1176 = vmul.f32 %v843, %v1048
        %v1177 = vmul.f32 %v846, %v1063
        %v1178 = vmul.f32 %v848, %v1078
        %v1179 = vmul.f32 %v851, %v1093
        %v1180 = vmul.f32 %v853, %v1108
        %v1181 = vmul.f32 %v856, %v1123
        %v1182 = vmul.f32 %v858, %v1138
        %v1183 = vmul.f32 %v861, %v1153
        %v1184 = vmul.f32 %v863, %v1168
        %v1185 = vpack.c.bf16 %v1170, %v1169
        %v1186 = vpack.c.bf16 %v1172, %v1171
        %v1187 = vpack.c.bf16 %v1174, %v1173
        %v1188 = vpack.c.bf16 %v1176, %v1175
        %v1189 = vpack.c.bf16 %v1178, %v1177
        %v1190 = vpack.c.bf16 %v1180, %v1179
        %v1191 = vpack.c.bf16 %v1182, %v1181
        %v1192 = vpack.c.bf16 %v1184, %v1183
        %v1193 = vld [vmem:[%s5] sm:$0xf]
        %v1194 = vld [vmem:[%s5 + $0x4] sm:$0xf]
        %v1195 = vld [vmem:[%s5 + $0x8] sm:$0xf]
        %v1196 = vld [vmem:[%s5 + $0xc] sm:$0xf]
        %v1197 = vld [vmem:[%s5 + $0x10] sm:$0xf]
        %v1198 = vld [vmem:[%s5 + $0x14] sm:$0xf]
        %v1199 = vld [vmem:[%s5 + $0x18] sm:$0xf]
        %v1200 = vld [vmem:[%s5 + $0x1c] sm:$0xf]
        %v1201 = vld [vmem:[%s5 + $0x20] sm:$0xf]
        %v1202 = vld [vmem:[%s5 + $0x24] sm:$0xf]
        %v1203 = vld [vmem:[%s5 + $0x28] sm:$0xf]
        %v1204 = vld [vmem:[%s5 + $0x2c] sm:$0xf]
        %v1205 = vld [vmem:[%s5 + $0x30] sm:$0xf]
        %v1206 = vld [vmem:[%s5 + $0x34] sm:$0xf]
        %v1207 = vld [vmem:[%s5 + $0x38] sm:$0xf]
        %v1208 = vld [vmem:[%s5 + $0x3c] sm:$0xf]
        %s1209 = sld [smem:[#allocation2]]
        %v1210 = vstv %s1209
        %v1227 = vunpack.c.l.b16 %v1193
        %v1228 = vunpack.c.l.b16 %v1194
        %v1229 = vunpack.c.l.b16 %v1195
        %v1230 = vunpack.c.l.b16 %v1196
        %v1231 = vunpack.c.l.b16 %v1197
        %v1232 = vunpack.c.l.b16 %v1198
        %v1233 = vunpack.c.l.b16 %v1199
        %v1234 = vunpack.c.l.b16 %v1200
        %v1235 = vunpack.c.l.b16 %v1201
        %v1236 = vunpack.c.l.b16 %v1202
        %v1237 = vunpack.c.l.b16 %v1203
        %v1238 = vunpack.c.l.b16 %v1204
        %v1239 = vunpack.c.l.b16 %v1205
        %v1240 = vunpack.c.l.b16 %v1206
        %v1241 = vunpack.c.l.b16 %v1207
        %v1242 = vunpack.c.l.b16 %v1208
        %v1243 = vpack.c.b16 %v1228, %v1227
        %v1244 = vpack.c.b16 %v1230, %v1229
        %v1245 = vpack.c.b16 %v1232, %v1231
        %v1246 = vpack.c.b16 %v1234, %v1233
        %v1247 = vpack.c.b16 %v1236, %v1235
        %v1248 = vpack.c.b16 %v1238, %v1237
        %v1249 = vpack.c.b16 %v1240, %v1239
        %v1250 = vpack.c.b16 %v1242, %v1241
        %1259 = vmatpush.bf16.msra.mxu0 %v1250
        %1260 = vmatpush.bf16.msra.mxu0 %v1249
        %1261 = vmatpush.bf16.msra.mxu0 %v1248
        %1262 = vmatpush.bf16.msra.mxu0 %v1247
        %1263 = vmatpush.bf16.msra.mxu0 %v1246
        %1264 = vmatpush.bf16.msra.mxu0 %v1245
        %1265 = vmatpush.bf16.msra.mxu0 %v1244
        %1266 = vmatpush.bf16.msra.mxu0 %v1243
        %1267 = vmatmul.bf16.gmra.mxu0 %v1185
        %v1268 = vpop.f32.mrf.mxu0
        %v1269 = vadd.f32 %v1210, %v1268
        %v1270 = vpop.f32.mrf.mxu0
        %v1271 = vadd.f32 %v1210, %v1270
        %1272 = vmatmul.bf16.gmra.mxu0 %v1186
        %v1273 = vpop.f32.mrf.mxu0
        %v1274 = vadd.f32 %v1210, %v1273
        %v1275 = vpop.f32.mrf.mxu0
        %v1276 = vadd.f32 %v1210, %v1275
        %1277 = vmatmul.bf16.gmra.mxu0 %v1187
        %v1278 = vpop.f32.mrf.mxu0
        %v1279 = vadd.f32 %v1210, %v1278
        %v1280 = vpop.f32.mrf.mxu0
        %v1281 = vadd.f32 %v1210, %v1280
        %1282 = vmatmul.bf16.gmra.mxu0 %v1188
        %v1283 = vpop.f32.mrf.mxu0
        %v1284 = vadd.f32 %v1210, %v1283
        %v1285 = vpop.f32.mrf.mxu0
        %v1286 = vadd.f32 %v1210, %v1285
        %1287 = vmatmul.bf16.gmra.mxu0 %v1189
        %v1288 = vpop.f32.mrf.mxu0
        %v1289 = vadd.f32 %v1210, %v1288
        %v1290 = vpop.f32.mrf.mxu0
        %v1291 = vadd.f32 %v1210, %v1290
        %1292 = vmatmul.bf16.gmra.mxu0 %v1190
        %v1293 = vpop.f32.mrf.mxu0
        %v1294 = vadd.f32 %v1210, %v1293
        %v1295 = vpop.f32.mrf.mxu0
        %v1296 = vadd.f32 %v1210, %v1295
        %1297 = vmatmul.bf16.gmra.mxu0 %v1191
        %v1298 = vpop.f32.mrf.mxu0
        %v1299 = vadd.f32 %v1210, %v1298
        %v1300 = vpop.f32.mrf.mxu0
        %v1301 = vadd.f32 %v1210, %v1300
        %1302 = vmatmul.bf16.gmra.mxu0 %v1192
        %v1303 = vpop.f32.mrf.mxu0
        %v1304 = vadd.f32 %v1210, %v1303
        %v1305 = vpop.f32.mrf.mxu0
        %v1306 = vadd.f32 %v1210, %v1305
        %1307 = vdwg.mxu0
        %v1308 = vxor.u32 %v1269, 2147483648
        %v1309 = vxor.u32 %v1271, 2147483648
        %v1310 = vxor.u32 %v1274, 2147483648
        %v1311 = vxor.u32 %v1276, 2147483648
        %v1312 = vxor.u32 %v1279, 2147483648
        %v1313 = vxor.u32 %v1281, 2147483648
        %v1314 = vxor.u32 %v1284, 2147483648
        %v1315 = vxor.u32 %v1286, 2147483648
        %v1316 = vxor.u32 %v1289, 2147483648
        %v1317 = vxor.u32 %v1291, 2147483648
        %v1318 = vxor.u32 %v1294, 2147483648
        %v1319 = vxor.u32 %v1296, 2147483648
        %v1320 = vxor.u32 %v1299, 2147483648
        %v1321 = vxor.u32 %v1301, 2147483648
        %v1322 = vxor.u32 %v1304, 2147483648
        %v1323 = vxor.u32 %v1306, 2147483648
        %v1324 = vmul.f32 %v1308, 1.442695
        %v1325 = vpow.pop %v1324
        %v1326 = vmul.f32 %v1309, 1.442695
        %v1327 = vpow.pop %v1326
        %v1328 = vmul.f32 %v1310, 1.442695
        %v1329 = vpow.pop %v1328
        %v1330 = vmul.f32 %v1311, 1.442695
        %v1331 = vpow.pop %v1330
        %v1332 = vmul.f32 %v1312, 1.442695
        %v1333 = vpow.pop %v1332
        %v1334 = vmul.f32 %v1313, 1.442695
        %v1335 = vpow.pop %v1334
        %v1336 = vmul.f32 %v1314, 1.442695
        %v1337 = vpow.pop %v1336
        %v1338 = vmul.f32 %v1315, 1.442695
        %v1339 = vpow.pop %v1338
        %v1340 = vmul.f32 %v1316, 1.442695
        %v1341 = vpow.pop %v1340
        %v1342 = vmul.f32 %v1317, 1.442695
        %v1343 = vpow.pop %v1342
        %v1344 = vmul.f32 %v1318, 1.442695
        %v1345 = vpow.pop %v1344
        %v1346 = vmul.f32 %v1319, 1.442695
        %v1347 = vpow.pop %v1346
        %v1348 = vmul.f32 %v1320, 1.442695
        %v1349 = vpow.pop %v1348
        %v1350 = vmul.f32 %v1321, 1.442695
        %v1351 = vpow.pop %v1350
        %v1352 = vmul.f32 %v1322, 1.442695
        %v1353 = vpow.pop %v1352
        %v1354 = vmul.f32 %v1323, 1.442695
        %v1355 = vpow.pop %v1354
        %v1356 = vadd.f32 %v1325, 1.0
        %v1357 = vadd.f32 %v1327, 1.0
        %v1358 = vadd.f32 %v1329, 1.0
        %v1359 = vadd.f32 %v1331, 1.0
        %v1360 = vadd.f32 %v1333, 1.0
        %v1361 = vadd.f32 %v1335, 1.0
        %v1362 = vadd.f32 %v1337, 1.0
        %v1363 = vadd.f32 %v1339, 1.0
        %v1364 = vadd.f32 %v1341, 1.0
        %v1365 = vadd.f32 %v1343, 1.0
        %v1366 = vadd.f32 %v1345, 1.0
        %v1367 = vadd.f32 %v1347, 1.0
        %v1368 = vadd.f32 %v1349, 1.0
        %v1369 = vadd.f32 %v1351, 1.0
        %v1370 = vadd.f32 %v1353, 1.0
        %v1371 = vadd.f32 %v1355, 1.0
        %v1372 = vrcp.pop %v1356
        %v1373 = vmul.f32 %v1356, %v1372
        %v1374 = vsub.f32 1.0, %v1373
        %v1375 = vmul.f32 %v1372, %v1374
        %v1376 = vadd.f32 %v1372, %v1375
        %vm1377 = vweird.f32 %v1356
        %vm1378 = vweird.f32 %v1372
        %vm1379 = vmor %vm1377, %vm1378
        %v1380 = vsel %vm1379, %v1372, %v1376
        %v1381 = vand.u32 2147483647, %v1356
        %vm1382 = vcmp.eq.f32.partialorder %v1381, 8.507059e+37
        %v1383 = vand.u32 %v1356, 2147483648
        %v1384 = vor.u32 1.1754944e-38, %v1383
        %v1385 = vsel %vm1382, %v1384, %v1380
        %v1386 = vmul.f32 1.0, %v1385
        %v1387 = vrcp.pop %v1357
        %v1388 = vmul.f32 %v1357, %v1387
        %v1389 = vsub.f32 1.0, %v1388
        %v1390 = vmul.f32 %v1387, %v1389
        %v1391 = vadd.f32 %v1387, %v1390
        %vm1392 = vweird.f32 %v1357
        %vm1393 = vweird.f32 %v1387
        %vm1394 = vmor %vm1392, %vm1393
        %v1395 = vsel %vm1394, %v1387, %v1391
        %v1396 = vand.u32 2147483647, %v1357
        %vm1397 = vcmp.eq.f32.partialorder %v1396, 8.507059e+37
        %v1398 = vand.u32 %v1357, 2147483648
        %v1399 = vor.u32 1.1754944e-38, %v1398
        %v1400 = vsel %vm1397, %v1399, %v1395
        %v1401 = vmul.f32 1.0, %v1400
        %v1402 = vrcp.pop %v1358
        %v1403 = vmul.f32 %v1358, %v1402
        %v1404 = vsub.f32 1.0, %v1403
        %v1405 = vmul.f32 %v1402, %v1404
        %v1406 = vadd.f32 %v1402, %v1405
        %vm1407 = vweird.f32 %v1358
        %vm1408 = vweird.f32 %v1402
        %vm1409 = vmor %vm1407, %vm1408
        %v1410 = vsel %vm1409, %v1402, %v1406
        %v1411 = vand.u32 2147483647, %v1358
        %vm1412 = vcmp.eq.f32.partialorder %v1411, 8.507059e+37
        %v1413 = vand.u32 %v1358, 2147483648
        %v1414 = vor.u32 1.1754944e-38, %v1413
        %v1415 = vsel %vm1412, %v1414, %v1410
        %v1416 = vmul.f32 1.0, %v1415
        %v1417 = vrcp.pop %v1359
        %v1418 = vmul.f32 %v1359, %v1417
        %v1419 = vsub.f32 1.0, %v1418
        %v1420 = vmul.f32 %v1417, %v1419
        %v1421 = vadd.f32 %v1417, %v1420
        %vm1422 = vweird.f32 %v1359
        %vm1423 = vweird.f32 %v1417
        %vm1424 = vmor %vm1422, %vm1423
        %v1425 = vsel %vm1424, %v1417, %v1421
        %v1426 = vand.u32 2147483647, %v1359
        %vm1427 = vcmp.eq.f32.partialorder %v1426, 8.507059e+37
        %v1428 = vand.u32 %v1359, 2147483648
        %v1429 = vor.u32 1.1754944e-38, %v1428
        %v1430 = vsel %vm1427, %v1429, %v1425
        %v1431 = vmul.f32 1.0, %v1430
        %v1432 = vrcp.pop %v1360
        %v1433 = vmul.f32 %v1360, %v1432
        %v1434 = vsub.f32 1.0, %v1433
        %v1435 = vmul.f32 %v1432, %v1434
        %v1436 = vadd.f32 %v1432, %v1435
        %vm1437 = vweird.f32 %v1360
        %vm1438 = vweird.f32 %v1432
        %vm1439 = vmor %vm1437, %vm1438
        %v1440 = vsel %vm1439, %v1432, %v1436
        %v1441 = vand.u32 2147483647, %v1360
        %vm1442 = vcmp.eq.f32.partialorder %v1441, 8.507059e+37
        %v1443 = vand.u32 %v1360, 2147483648
        %v1444 = vor.u32 1.1754944e-38, %v1443
        %v1445 = vsel %vm1442, %v1444, %v1440
        %v1446 = vmul.f32 1.0, %v1445
        %v1447 = vrcp.pop %v1361
        %v1448 = vmul.f32 %v1361, %v1447
        %v1449 = vsub.f32 1.0, %v1448
        %v1450 = vmul.f32 %v1447, %v1449
        %v1451 = vadd.f32 %v1447, %v1450
        %vm1452 = vweird.f32 %v1361
        %vm1453 = vweird.f32 %v1447
        %vm1454 = vmor %vm1452, %vm1453
        %v1455 = vsel %vm1454, %v1447, %v1451
        %v1456 = vand.u32 2147483647, %v1361
        %vm1457 = vcmp.eq.f32.partialorder %v1456, 8.507059e+37
        %v1458 = vand.u32 %v1361, 2147483648
        %v1459 = vor.u32 1.1754944e-38, %v1458
        %v1460 = vsel %vm1457, %v1459, %v1455
        %v1461 = vmul.f32 1.0, %v1460
        %v1462 = vrcp.pop %v1362
        %v1463 = vmul.f32 %v1362, %v1462
        %v1464 = vsub.f32 1.0, %v1463
        %v1465 = vmul.f32 %v1462, %v1464
        %v1466 = vadd.f32 %v1462, %v1465
        %vm1467 = vweird.f32 %v1362
        %vm1468 = vweird.f32 %v1462
        %vm1469 = vmor %vm1467, %vm1468
        %v1470 = vsel %vm1469, %v1462, %v1466
        %v1471 = vand.u32 2147483647, %v1362
        %vm1472 = vcmp.eq.f32.partialorder %v1471, 8.507059e+37
        %v1473 = vand.u32 %v1362, 2147483648
        %v1474 = vor.u32 1.1754944e-38, %v1473
        %v1475 = vsel %vm1472, %v1474, %v1470
        %v1476 = vmul.f32 1.0, %v1475
        %v1477 = vrcp.pop %v1363
        %v1478 = vmul.f32 %v1363, %v1477
        %v1479 = vsub.f32 1.0, %v1478
        %v1480 = vmul.f32 %v1477, %v1479
        %v1481 = vadd.f32 %v1477, %v1480
        %vm1482 = vweird.f32 %v1363
        %vm1483 = vweird.f32 %v1477
        %vm1484 = vmor %vm1482, %vm1483
        %v1485 = vsel %vm1484, %v1477, %v1481
        %v1486 = vand.u32 2147483647, %v1363
        %vm1487 = vcmp.eq.f32.partialorder %v1486, 8.507059e+37
        %v1488 = vand.u32 %v1363, 2147483648
        %v1489 = vor.u32 1.1754944e-38, %v1488
        %v1490 = vsel %vm1487, %v1489, %v1485
        %v1491 = vmul.f32 1.0, %v1490
        %v1492 = vrcp.pop %v1364
        %v1493 = vmul.f32 %v1364, %v1492
        %v1494 = vsub.f32 1.0, %v1493
        %v1495 = vmul.f32 %v1492, %v1494
        %v1496 = vadd.f32 %v1492, %v1495
        %vm1497 = vweird.f32 %v1364
        %vm1498 = vweird.f32 %v1492
        %vm1499 = vmor %vm1497, %vm1498
        %v1500 = vsel %vm1499, %v1492, %v1496
        %v1501 = vand.u32 2147483647, %v1364
        %vm1502 = vcmp.eq.f32.partialorder %v1501, 8.507059e+37
        %v1503 = vand.u32 %v1364, 2147483648
        %v1504 = vor.u32 1.1754944e-38, %v1503
        %v1505 = vsel %vm1502, %v1504, %v1500
        %v1506 = vmul.f32 1.0, %v1505
        %v1507 = vrcp.pop %v1365
        %v1508 = vmul.f32 %v1365, %v1507
        %v1509 = vsub.f32 1.0, %v1508
        %v1510 = vmul.f32 %v1507, %v1509
        %v1511 = vadd.f32 %v1507, %v1510
        %vm1512 = vweird.f32 %v1365
        %vm1513 = vweird.f32 %v1507
        %vm1514 = vmor %vm1512, %vm1513
        %v1515 = vsel %vm1514, %v1507, %v1511
        %v1516 = vand.u32 2147483647, %v1365
        %vm1517 = vcmp.eq.f32.partialorder %v1516, 8.507059e+37
        %v1518 = vand.u32 %v1365, 2147483648
        %v1519 = vor.u32 1.1754944e-38, %v1518
        %v1520 = vsel %vm1517, %v1519, %v1515
        %v1521 = vmul.f32 1.0, %v1520
        %v1522 = vrcp.pop %v1366
        %v1523 = vmul.f32 %v1366, %v1522
        %v1524 = vsub.f32 1.0, %v1523
        %v1525 = vmul.f32 %v1522, %v1524
        %v1526 = vadd.f32 %v1522, %v1525
        %vm1527 = vweird.f32 %v1366
        %vm1528 = vweird.f32 %v1522
        %vm1529 = vmor %vm1527, %vm1528
        %v1530 = vsel %vm1529, %v1522, %v1526
        %v1531 = vand.u32 2147483647, %v1366
        %vm1532 = vcmp.eq.f32.partialorder %v1531, 8.507059e+37
        %v1533 = vand.u32 %v1366, 2147483648
        %v1534 = vor.u32 1.1754944e-38, %v1533
        %v1535 = vsel %vm1532, %v1534, %v1530
        %v1536 = vmul.f32 1.0, %v1535
        %v1537 = vrcp.pop %v1367
        %v1538 = vmul.f32 %v1367, %v1537
        %v1539 = vsub.f32 1.0, %v1538
        %v1540 = vmul.f32 %v1537, %v1539
        %v1541 = vadd.f32 %v1537, %v1540
        %vm1542 = vweird.f32 %v1367
        %vm1543 = vweird.f32 %v1537
        %vm1544 = vmor %vm1542, %vm1543
        %v1545 = vsel %vm1544, %v1537, %v1541
        %v1546 = vand.u32 2147483647, %v1367
        %vm1547 = vcmp.eq.f32.partialorder %v1546, 8.507059e+37
        %v1548 = vand.u32 %v1367, 2147483648
        %v1549 = vor.u32 1.1754944e-38, %v1548
        %v1550 = vsel %vm1547, %v1549, %v1545
        %v1551 = vmul.f32 1.0, %v1550
        %v1552 = vrcp.pop %v1368
        %v1553 = vmul.f32 %v1368, %v1552
        %v1554 = vsub.f32 1.0, %v1553
        %v1555 = vmul.f32 %v1552, %v1554
        %v1556 = vadd.f32 %v1552, %v1555
        %vm1557 = vweird.f32 %v1368
        %vm1558 = vweird.f32 %v1552
        %vm1559 = vmor %vm1557, %vm1558
        %v1560 = vsel %vm1559, %v1552, %v1556
        %v1561 = vand.u32 2147483647, %v1368
        %vm1562 = vcmp.eq.f32.partialorder %v1561, 8.507059e+37
        %v1563 = vand.u32 %v1368, 2147483648
        %v1564 = vor.u32 1.1754944e-38, %v1563
        %v1565 = vsel %vm1562, %v1564, %v1560
        %v1566 = vmul.f32 1.0, %v1565
        %v1567 = vrcp.pop %v1369
        %v1568 = vmul.f32 %v1369, %v1567
        %v1569 = vsub.f32 1.0, %v1568
        %v1570 = vmul.f32 %v1567, %v1569
        %v1571 = vadd.f32 %v1567, %v1570
        %vm1572 = vweird.f32 %v1369
        %vm1573 = vweird.f32 %v1567
        %vm1574 = vmor %vm1572, %vm1573
        %v1575 = vsel %vm1574, %v1567, %v1571
        %v1576 = vand.u32 2147483647, %v1369
        %vm1577 = vcmp.eq.f32.partialorder %v1576, 8.507059e+37
        %v1578 = vand.u32 %v1369, 2147483648
        %v1579 = vor.u32 1.1754944e-38, %v1578
        %v1580 = vsel %vm1577, %v1579, %v1575
        %v1581 = vmul.f32 1.0, %v1580
        %v1582 = vrcp.pop %v1370
        %v1583 = vmul.f32 %v1370, %v1582
        %v1584 = vsub.f32 1.0, %v1583
        %v1585 = vmul.f32 %v1582, %v1584
        %v1586 = vadd.f32 %v1582, %v1585
        %vm1587 = vweird.f32 %v1370
        %vm1588 = vweird.f32 %v1582
        %vm1589 = vmor %vm1587, %vm1588
        %v1590 = vsel %vm1589, %v1582, %v1586
        %v1591 = vand.u32 2147483647, %v1370
        %vm1592 = vcmp.eq.f32.partialorder %v1591, 8.507059e+37
        %v1593 = vand.u32 %v1370, 2147483648
        %v1594 = vor.u32 1.1754944e-38, %v1593
        %v1595 = vsel %vm1592, %v1594, %v1590
        %v1596 = vmul.f32 1.0, %v1595
        %v1597 = vrcp.pop %v1371
        %v1598 = vmul.f32 %v1371, %v1597
        %v1599 = vsub.f32 1.0, %v1598
        %v1600 = vmul.f32 %v1597, %v1599
        %v1601 = vadd.f32 %v1597, %v1600
        %vm1602 = vweird.f32 %v1371
        %vm1603 = vweird.f32 %v1597
        %vm1604 = vmor %vm1602, %vm1603
        %v1605 = vsel %vm1604, %v1597, %v1601
        %v1606 = vand.u32 2147483647, %v1371
        %vm1607 = vcmp.eq.f32.partialorder %v1606, 8.507059e+37
        %v1608 = vand.u32 %v1371, 2147483648
        %v1609 = vor.u32 1.1754944e-38, %v1608
        %v1610 = vsel %vm1607, %v1609, %v1605
        %v1611 = vmul.f32 1.0, %v1610
        %vm1612 = vcmask 7168
        %1613 = vst.msk [vmem:[%s281] sm:$0xff] %vm1612, %v1386
        %1614 = vst.msk [vmem:[%s281 + $0x8] sm:$0xff] %vm1612, %v1401
        %1615 = vst.msk [vmem:[%s281 + $0x10] sm:$0xff] %vm1612, %v1416
        %1616 = vst.msk [vmem:[%s281 + $0x18] sm:$0xff] %vm1612, %v1431
        %1617 = vst.msk [vmem:[%s281 + $0x20] sm:$0xff] %vm1612, %v1446
        %1618 = vst.msk [vmem:[%s281 + $0x28] sm:$0xff] %vm1612, %v1461
        %1619 = vst.msk [vmem:[%s281 + $0x30] sm:$0xff] %vm1612, %v1476
        %1620 = vst.msk [vmem:[%s281 + $0x38] sm:$0xff] %vm1612, %v1491
        %1621 = vst.msk [vmem:[%s281 + $0x40] sm:$0xff] %vm1612, %v1506
        %1622 = vst.msk [vmem:[%s281 + $0x48] sm:$0xff] %vm1612, %v1521
        %1623 = vst.msk [vmem:[%s281 + $0x50] sm:$0xff] %vm1612, %v1536
        %1624 = vst.msk [vmem:[%s281 + $0x58] sm:$0xff] %vm1612, %v1551
        %1625 = vst.msk [vmem:[%s281 + $0x60] sm:$0xff] %vm1612, %v1566
        %1626 = vst.msk [vmem:[%s281 + $0x68] sm:$0xff] %vm1612, %v1581
        %1627 = vst.msk [vmem:[%s281 + $0x70] sm:$0xff] %vm1612, %v1596
        %1628 = vst.msk [vmem:[%s281 + $0x78] sm:$0xff] %vm1612, %v1611
        %s1629 = sand.u32 %s179, 1
        %s1630 = sand.u32 %s179, 1
        %s1631 = smul.addr %s1630, 128
        %s1632 = scalar_lea.vmem [#allocation3], %s1631
        // Predicated region
        $region49: #{tpu_custom_call.1} parent=47 // pred_check
          %p1633 = pneg %p189
        $region50: #{tpu_custom_call.1} parent=47 // pred_check_branch
          %1635 = sbr.rel (%p1633) target = $region52
        $region51: #{tpu_custom_call.1} parent=47 // pred_region
          %s1636 = smul.u32 16, %s19
          %s1637 = ssub.s32 25, %s1636
          %p1638 = scmp.lt.s32.totalorder %s1637, 16
          %s1639 = scalar_select %p1638, %s1637, 16
          %s1640 = smul.u32 8, %s1639
          %p1641 = scmp.ne.s32.totalorder 0, %s1640
          %s1642 = smul.addr %s1636, 8
          %s1643 = scalar_lea.vmem %s7, %s1642
          // Predicated region
          $region53: #{tpu_custom_call.1} parent=51 // pred_check
            %p1644 = pneg %p1641
          $region54: #{tpu_custom_call.1} parent=51 // pred_check_branch
            %1646 = sbr.rel (%p1644) target = $region56
          $region55: #{tpu_custom_call.1} parent=51 // pred_region
            // Predicated region
            $region57: #{tpu_custom_call.1} parent=55 // pred_check
              _
            $region58: #{tpu_custom_call.1} parent=55 // pred_check_branch
              %1648 = sbr.rel (0) target = $region60
            $region59: #{tpu_custom_call.1} parent=55 // pred_region
              // Predicated region
              $region79: #{tpu_custom_call.1} parent=59 // pred_check
                _
              $region80: #{tpu_custom_call.1} parent=59 // pred_check_branch
                %1728 = sbr.rel (0) target = $region82
              $region81: #{tpu_custom_call.1} parent=59 // pred_region
                %s1729 = sshrl.u32 %s1639, 4
                // While loop
                $region83: #{tpu_custom_call.1} parent=81 // loop_pre_header
                  _
                $region84: #{tpu_custom_call.1} parent=81 // loop_header
                  %s1731 = sphi 0, %s1733
                  %p1732 = scmp.ge.s32.totalorder %s1731, %s1729
                  %s1736 = sphi 0, %s1773
                  %s1737 = sphi %s1632, %s1776
                  %s1738 = sphi %s1643, %s1777
                $region85: #{tpu_custom_call.1} parent=81 // loop_header_branch
                  %1735 = sbr.rel (%p1732) target = $region89
                $region86: #{tpu_custom_call.1} parent=81 // loop_body
                  %v1739 = vld [vmem:[%s1737] sm:$0xff]
                  %1740 = vst [vmem:[%s1738] sm:$0xff] %v1739
                  %v1741 = vld [vmem:[%s1737 + $0x8] sm:$0xff]
                  %1742 = vst [vmem:[%s1738 + $0x8] sm:$0xff] %v1741
                  %v1743 = vld [vmem:[%s1737 + $0x10] sm:$0xff]
                  %1744 = vst [vmem:[%s1738 + $0x10] sm:$0xff] %v1743
                  %v1745 = vld [vmem:[%s1737 + $0x18] sm:$0xff]
                  %1746 = vst [vmem:[%s1738 + $0x18] sm:$0xff] %v1745
                  %v1747 = vld [vmem:[%s1737 + $0x20] sm:$0xff]
                  %1748 = vst [vmem:[%s1738 + $0x20] sm:$0xff] %v1747
                  %v1749 = vld [vmem:[%s1737 + $0x28] sm:$0xff]
                  %1750 = vst [vmem:[%s1738 + $0x28] sm:$0xff] %v1749
                  %v1751 = vld [vmem:[%s1737 + $0x30] sm:$0xff]
                  %1752 = vst [vmem:[%s1738 + $0x30] sm:$0xff] %v1751
                  %v1753 = vld [vmem:[%s1737 + $0x38] sm:$0xff]
                  %1754 = vst [vmem:[%s1738 + $0x38] sm:$0xff] %v1753
                  %v1755 = vld [vmem:[%s1737 + $0x40] sm:$0xff]
                  %1756 = vst [vmem:[%s1738 + $0x40] sm:$0xff] %v1755
                  %v1757 = vld [vmem:[%s1737 + $0x48] sm:$0xff]
                  %1758 = vst [vmem:[%s1738 + $0x48] sm:$0xff] %v1757
                  %v1759 = vld [vmem:[%s1737 + $0x50] sm:$0xff]
                  %1760 = vst [vmem:[%s1738 + $0x50] sm:$0xff] %v1759
                  %v1761 = vld [vmem:[%s1737 + $0x58] sm:$0xff]
                  %1762 = vst [vmem:[%s1738 + $0x58] sm:$0xff] %v1761
                  %v1763 = vld [vmem:[%s1737 + $0x60] sm:$0xff]
                  %1764 = vst [vmem:[%s1738 + $0x60] sm:$0xff] %v1763
                  %v1765 = vld [vmem:[%s1737 + $0x68] sm:$0xff]
                  %1766 = vst [vmem:[%s1738 + $0x68] sm:$0xff] %v1765
                  %v1767 = vld [vmem:[%s1737 + $0x70] sm:$0xff]
                  %1768 = vst [vmem:[%s1738 + $0x70] sm:$0xff] %v1767
                  %v1769 = vld [vmem:[%s1737 + $0x78] sm:$0xff]
                  %1770 = vst [vmem:[%s1738 + $0x78] sm:$0xff] %v1769
                  %s1771 = sadd.s32 1, %s1736
                  %p1772 = scmp.ge.s32.totalorder %s1771, %s1729
                  %s1773 = scalar_select %p1772, 0, %s1771
                  %s1774 = smul.u32 %s1773, 128
                  %s1775 = smul.u32 %s1773, 128
                  %s1776 = scalar_lea.vmem %s1632, %s1774 [#allocation3]
                  %s1777 = scalar_lea.vmem %s1643, %s1775
                $region87: #{tpu_custom_call.1} parent=81 // loop_footer
                  %s1733 = sadd.s32 %s1731, 1
                $region88: #{tpu_custom_call.1} parent=81 // loop_footer_branch
                  %1730 = sbr.rel target = $region84
                $region89: #{tpu_custom_call.1} parent=81 // loop_exit
                  _
                %s1778 = sshrl.u32 %s1639, 4
                %s1779 = sand.u32 %s1639, 15
                %s1780 = smul.u32 %s1778, 16
                %s1781 = smul.u32 8, %s1780
                %s1782 = scalar_lea.vmem %s1632, %s1781 [#allocation3]
                %s1783 = smul.u32 8, %s1780
                %s1784 = scalar_lea.vmem %s1643, %s1783
                // While loop
                $region90: #{tpu_custom_call.1} parent=81 // loop_pre_header
                  _
                $region91: #{tpu_custom_call.1} parent=81 // loop_header
                  %s1786 = sphi 0, %s1788
                  %p1787 = scmp.ge.s32.totalorder %s1786, %s1779
                  %s1791 = sphi 0, %s1798
                  %s1792 = sphi %s1782, %s1801
                  %s1793 = sphi %s1784, %s1802
                $region92: #{tpu_custom_call.1} parent=81 // loop_header_branch
                  %1790 = sbr.rel (%p1787) target = $region96
                $region93: #{tpu_custom_call.1} parent=81 // loop_body
                  %v1794 = vld [vmem:[%s1792] sm:$0xff]
                  %1795 = vst [vmem:[%s1793] sm:$0xff] %v1794
                  %s1796 = sadd.s32 1, %s1791
                  %p1797 = scmp.ge.s32.totalorder %s1796, %s1779
                  %s1798 = scalar_select %p1797, 0, %s1796
                  %s1799 = smul.u32 %s1798, 8
                  %s1800 = smul.u32 %s1798, 8
                  %s1801 = scalar_lea.vmem %s1782, %s1799 [#allocation3]
                  %s1802 = scalar_lea.vmem %s1784, %s1800
                $region94: #{tpu_custom_call.1} parent=81 // loop_footer
                  %s1788 = sadd.s32 %s1786, 1
                $region95: #{tpu_custom_call.1} parent=81 // loop_footer_branch
                  %1785 = sbr.rel target = $region91
                $region96: #{tpu_custom_call.1} parent=81 // loop_exit
                  _
              $region82: #{tpu_custom_call.1} parent=59 // pred_fallthru
                _
              // Predicated region
              $region97: #{tpu_custom_call.1} parent=59 // pred_check
                _
              $region98: #{tpu_custom_call.1} parent=59 // pred_check_branch
                %1804 = sbr.rel target = $region100
              $region99: #{tpu_custom_call.1} parent=59 // pred_region
                _
              $region100: #{tpu_custom_call.1} parent=59 // pred_fallthru
                _
            $region60: #{tpu_custom_call.1} parent=55 // pred_fallthru
              _
            // Predicated region
            $region61: #{tpu_custom_call.1} parent=55 // pred_check
              _
            $region62: #{tpu_custom_call.1} parent=55 // pred_check_branch
              %1650 = sbr.rel target = $region64
            $region63: #{tpu_custom_call.1} parent=55 // pred_region
              %s1652 = ssub.s32 256, 1
              %s1653 = sshrl.u32 %s1639, 4
              // While loop
              $region65: #{tpu_custom_call.1} parent=63 // loop_pre_header
                _
              $region66: #{tpu_custom_call.1} parent=63 // loop_header
                %s1655 = sphi 0, %s1657
                %p1656 = scmp.ge.s32.totalorder %s1655, %s1653
                %s1660 = sphi 0, %s1697
                %s1661 = sphi %s1632, %s1700
                %s1662 = sphi %s1643, %s1701
              $region67: #{tpu_custom_call.1} parent=63 // loop_header_branch
                %1659 = sbr.rel (%p1656) target = $region71
              $region68: #{tpu_custom_call.1} parent=63 // loop_body
                %v1663 = vld [vmem:[%s1661] sm:%s1652]
                %1664 = vst [vmem:[%s1662] sm:%s1652] %v1663
                %v1665 = vld [vmem:[%s1661 + $0x8] sm:%s1652]
                %1666 = vst [vmem:[%s1662 + $0x8] sm:%s1652] %v1665
                %v1667 = vld [vmem:[%s1661 + $0x10] sm:%s1652]
                %1668 = vst [vmem:[%s1662 + $0x10] sm:%s1652] %v1667
                %v1669 = vld [vmem:[%s1661 + $0x18] sm:%s1652]
                %1670 = vst [vmem:[%s1662 + $0x18] sm:%s1652] %v1669
                %v1671 = vld [vmem:[%s1661 + $0x20] sm:%s1652]
                %1672 = vst [vmem:[%s1662 + $0x20] sm:%s1652] %v1671
                %v1673 = vld [vmem:[%s1661 + $0x28] sm:%s1652]
                %1674 = vst [vmem:[%s1662 + $0x28] sm:%s1652] %v1673
                %v1675 = vld [vmem:[%s1661 + $0x30] sm:%s1652]
                %1676 = vst [vmem:[%s1662 + $0x30] sm:%s1652] %v1675
                %v1677 = vld [vmem:[%s1661 + $0x38] sm:%s1652]
                %1678 = vst [vmem:[%s1662 + $0x38] sm:%s1652] %v1677
                %v1679 = vld [vmem:[%s1661 + $0x40] sm:%s1652]
                %1680 = vst [vmem:[%s1662 + $0x40] sm:%s1652] %v1679
                %v1681 = vld [vmem:[%s1661 + $0x48] sm:%s1652]
                %1682 = vst [vmem:[%s1662 + $0x48] sm:%s1652] %v1681
                %v1683 = vld [vmem:[%s1661 + $0x50] sm:%s1652]
                %1684 = vst [vmem:[%s1662 + $0x50] sm:%s1652] %v1683
                %v1685 = vld [vmem:[%s1661 + $0x58] sm:%s1652]
                %1686 = vst [vmem:[%s1662 + $0x58] sm:%s1652] %v1685
                %v1687 = vld [vmem:[%s1661 + $0x60] sm:%s1652]
                %1688 = vst [vmem:[%s1662 + $0x60] sm:%s1652] %v1687
                %v1689 = vld [vmem:[%s1661 + $0x68] sm:%s1652]
                %1690 = vst [vmem:[%s1662 + $0x68] sm:%s1652] %v1689
                %v1691 = vld [vmem:[%s1661 + $0x70] sm:%s1652]
                %1692 = vst [vmem:[%s1662 + $0x70] sm:%s1652] %v1691
                %v1693 = vld [vmem:[%s1661 + $0x78] sm:%s1652]
                %1694 = vst [vmem:[%s1662 + $0x78] sm:%s1652] %v1693
                %s1695 = sadd.s32 1, %s1660
                %p1696 = scmp.ge.s32.totalorder %s1695, %s1653
                %s1697 = scalar_select %p1696, 0, %s1695
                %s1698 = smul.u32 %s1697, 128
                %s1699 = smul.u32 %s1697, 128
                %s1700 = scalar_lea.vmem %s1632, %s1698 [#allocation3]
                %s1701 = scalar_lea.vmem %s1643, %s1699
              $region69: #{tpu_custom_call.1} parent=63 // loop_footer
                %s1657 = sadd.s32 %s1655, 1
              $region70: #{tpu_custom_call.1} parent=63 // loop_footer_branch
                %1654 = sbr.rel target = $region66
              $region71: #{tpu_custom_call.1} parent=63 // loop_exit
                _
              %s1702 = sshrl.u32 %s1639, 4
              %s1703 = sand.u32 %s1639, 15
              %s1704 = smul.u32 %s1702, 16
              %s1705 = smul.u32 8, %s1704
              %s1706 = scalar_lea.vmem %s1632, %s1705 [#allocation3]
              %s1707 = smul.u32 8, %s1704
              %s1708 = scalar_lea.vmem %s1643, %s1707
              // While loop
              $region72: #{tpu_custom_call.1} parent=63 // loop_pre_header
                _
              $region73: #{tpu_custom_call.1} parent=63 // loop_header
                %s1710 = sphi 0, %s1712
                %p1711 = scmp.ge.s32.totalorder %s1710, %s1703
                %s1715 = sphi 0, %s1722
                %s1716 = sphi %s1706, %s1725
                %s1717 = sphi %s1708, %s1726
              $region74: #{tpu_custom_call.1} parent=63 // loop_header_branch
                %1714 = sbr.rel (%p1711) target = $region78
              $region75: #{tpu_custom_call.1} parent=63 // loop_body
                %v1718 = vld [vmem:[%s1716] sm:%s1652]
                %1719 = vst [vmem:[%s1717] sm:%s1652] %v1718
                %s1720 = sadd.s32 1, %s1715
                %p1721 = scmp.ge.s32.totalorder %s1720, %s1703
                %s1722 = scalar_select %p1721, 0, %s1720
                %s1723 = smul.u32 %s1722, 8
                %s1724 = smul.u32 %s1722, 8
                %s1725 = scalar_lea.vmem %s1706, %s1723 [#allocation3]
                %s1726 = scalar_lea.vmem %s1708, %s1724
              $region76: #{tpu_custom_call.1} parent=63 // loop_footer
                %s1712 = sadd.s32 %s1710, 1
              $region77: #{tpu_custom_call.1} parent=63 // loop_footer_branch
                %1709 = sbr.rel target = $region73
              $region78: #{tpu_custom_call.1} parent=63 // loop_exit
                _
            $region64: #{tpu_custom_call.1} parent=55 // pred_fallthru
              _
          $region56: #{tpu_custom_call.1} parent=51 // pred_fallthru
            _
          %1805 = vnop
        $region52: #{tpu_custom_call.1} parent=47 // pred_fallthru
          _
      $region48: #{tpu_custom_call.1} parent=5 // pred_fallthru
        _
      %p1806 = scmp.le.s32.totalorder 2, %s14
      // Predicated region
      $region101: #{tpu_custom_call.1} parent=5 // pred_check
        %p1807 = pneg %p1806
      $region102: #{tpu_custom_call.1} parent=5 // pred_check_branch
        %1809 = sbr.rel (%p1807) target = $region104
      $region103: #{tpu_custom_call.1} parent=5 // pred_region
        %s1810 = ssub.s32 %s14, 2
        // Predicated region
        $region105: #{tpu_custom_call.1} parent=103 // pred_check
          %p1811 = pneg %p195
        $region106: #{tpu_custom_call.1} parent=103 // pred_check_branch
          %1813 = sbr.rel (%p1811) target = $region108
        $region107: #{tpu_custom_call.1} parent=103 // pred_region
          %s1814 = sand.u32 %s180, 1
          %s1815 = sand.u32 %s180, 1
          %s1816 = smul.addr %s1815, 128
          %s1817 = scalar_lea.vmem [#allocation3], %s1816
        $region108: #{tpu_custom_call.1} parent=103 // pred_fallthru
          _
      $region104: #{tpu_custom_call.1} parent=5 // pred_fallthru
        _
    $region6: #{tpu_custom_call.1} parent=1 // loop_footer
      %s18 = sadd.s32 1, %s14
    $region7: #{tpu_custom_call.1} parent=1 // loop_footer_branch
      %13 = sbr.rel target = $region3
    $region8: #{tpu_custom_call.1} parent=1 // loop_exit
      _

</llo_original>
